<compile_context>
chip_gen: v5e
topology: v5e:2x2
jax: 0.10.0
libtpu: 0.0.40
codegen_flags: <defaults>
</compile_context>

<pallas_src>
import functools
import math

import jax
import jax.numpy as jnp
from jax.experimental import pallas as pl
from jax.experimental.pallas import tpu as pltpu


# ---------------------------------------------------------------------------
# MADE masks (exactly as nflows builds them: sequential degrees, residual blocks)
# ---------------------------------------------------------------------------
def _made_masks(F, H):
    d_in = jnp.arange(1, F + 1)                            # input degrees 1..F
    max_ = max(1, F - 1)
    min_ = min(1, F - 1)
    d_h = jnp.arange(H) % max_ + min_                      # hidden degrees
    # masks in (in, out) layout (transposed wrt torch's (out, in) weight layout)
    m_init = (d_h[None, :] >= d_in[:, None]).astype(jnp.float32)    # (F, H)
    m_hid = (d_h[None, :] >= d_h[:, None]).astype(jnp.float32)      # (H, H)
    # output degrees: [scale block | shift block]
    d_out = jnp.concatenate([jnp.arange(1, F + 1), jnp.arange(1, F + 1)])
    m_fin = (d_out[None, :] > d_h[:, None]).astype(jnp.float32)     # (H, 2F)
    return m_init, m_hid, m_fin


_PARAM_NAMES = [
    "w_init", "b_init", "w_ctx0", "b_ctx0",
    "w_b1a", "b_b1a", "w_b1b", "b_b1b", "w_b1c", "b_b1c",
    "w_b2a", "b_b2a", "w_b2b", "b_b2b", "w_b2c", "b_b2c",
    "w_fin", "b_fin",
]


def init_maf_params(key, num_inputs, num_hidden, condition_size, num_layers):
    """Deterministic synthetic init; masks are pre-multiplied into the weights."""
    F, H, C, L = num_inputs, num_hidden, condition_size, num_layers
    m_init, m_hid, m_fin = _made_masks(F, H)
    per_layer = {n: [] for n in _PARAM_NAMES}
    keys = jax.random.split(key, L)

    def nrm(k, shape, scale=0.2):
        return jax.random.normal(k, shape, dtype=jnp.float32) * scale

    for l in range(L):
        ks = jax.random.split(keys[l], 18)
        per_layer["w_init"].append(nrm(ks[0], (F, H)) * m_init)
        per_layer["b_init"].append(nrm(ks[1], (1, H)))
        per_layer["w_ctx0"].append(nrm(ks[2], (C, H)))
        per_layer["b_ctx0"].append(nrm(ks[3], (1, H)))
        for bi, blk in enumerate(("b1", "b2")):
            o = 4 + 6 * bi
            per_layer[f"w_{blk}a"].append(nrm(ks[o + 0], (H, H)) * m_hid)
            per_layer[f"b_{blk}a"].append(nrm(ks[o + 1], (1, H)))
            # second linear of the residual block: nflows zero_initialization (uniform +-1e-3)
            per_layer[f"w_{blk}b"].append(
                jax.random.uniform(ks[o + 2], (H, H), jnp.float32, -1e-3, 1e-3) * m_hid)
            per_layer[f"b_{blk}b"].append(
                jax.random.uniform(ks[o + 3], (1, H), jnp.float32, -1e-3, 1e-3))
            per_layer[f"w_{blk}c"].append(nrm(ks[o + 4], (C, H)))
            per_layer[f"b_{blk}c"].append(nrm(ks[o + 5], (1, H)))
        per_layer["w_fin"].append(nrm(ks[16], (H, 2 * F)) * m_fin)
        per_layer["b_fin"].append(nrm(ks[17], (1, 2 * F)))

    return {n: jnp.stack(per_layer[n], axis=0) for n in _PARAM_NAMES}


# ---------------------------------------------------------------------------
# Parameter packing (pure setup glue; numerically exact wrt unpacked params):
#   * fuse ALL layers' context weights into one (C, 3*L*HP) slab
#     column layout: [ ctx0(l=0..L-1) | gate1(l=0),gate2(l=0), ..., gate1(L-1),gate2(L-1) ]
#   * fold b_ctx0 into b_init (both live in the fused ctx bias row)
#   * fold the scale path's "+2.0" into the first F columns of b_fin
#   * pad hidden width to HP = multiple of 128 lanes
# ---------------------------------------------------------------------------
def pack_maf_params(p):
    L, F, H = p["w_init"].shape
    C = p["w_ctx0"].shape[1]
    two_f = p["w_fin"].shape[2]
    HP = ((H + 127) // 128) * 128                  # pad hidden width to full vreg lanes
    assert two_f <= HP, "packing assumes 2*F <= padded hidden width"

    def padw(a, rows, cols):                       # pad last two dims of an (L, r, c) stack
        return jnp.pad(a, ((0, 0), (0, rows - a.shape[1]), (0, cols - a.shape[2])))

    def padb(b):                                   # (L, 1, k) -> (L, 1, HP)
        return jnp.pad(b, ((0, 0), (0, 0), (0, HP - b.shape[2])))

    w_x = padw(p["w_init"], F, HP)                                     # (L, F, HP)

    # fused, layer-hoisted context projection weights/bias
    ctx0_w = padw(p["w_ctx0"], C, HP)                                  # (L, C, HP)
    g1_w = padw(p["w_b1c"], C, HP)
    g2_w = padw(p["w_b2c"], C, HP)
    ctx0_cols = jnp.concatenate([ctx0_w[l] for l in range(L)], axis=1)           # (C, L*HP)
    gate_cols = jnp.concatenate(
        [jnp.concatenate([g1_w[l], g2_w[l]], axis=1) for l in range(L)], axis=1)  # (C, 2L*HP)
    w_ctx = jnp.concatenate([ctx0_cols, gate_cols], axis=1)                       # (C, 3L*HP)

    b_ctx0 = padb(p["b_init"] + p["b_ctx0"])       # fold b_init into the ctx0 bias
    b_g1 = padb(p["b_b1c"])
    b_g2 = padb(p["b_b2c"])
    b_ctx = jnp.concatenate(
        [b_ctx0[l] for l in range(L)]
        + [b for l in range(L) for b in (b_g1[l], b_g2[l])], axis=1)              # (1, 3L*HP)

    # hidden residual-block weights
    hid = [padw(p["w_b1a"], HP, HP), padw(p["w_b1b"], HP, HP),
           padw(p["w_b2a"], HP, HP), padw(p["w_b2b"], HP, HP)]
    w_hid = jnp.stack(hid, axis=1).reshape(L * 4, HP, HP)              # (4L, HP, HP)

    # final masked linear; fold scale path's "+2.0" into its bias
    w_fin = padw(p["w_fin"], HP, two_f)                                # (L, HP, 2F)
    scale_shift = jnp.concatenate([jnp.full((1, 1, F), 2.0, jnp.float32),
                                   jnp.zeros((1, 1, F), jnp.float32)], axis=2)
    b_fin = padb(p["b_fin"] + scale_shift)                             # (L, 1, HP)

    # hidden/final bias slab per layer: rows [b1a, b1b, b2a, b2b, b_fin, 0, 0, 0]
    pad3 = jnp.zeros((L, 3, HP), jnp.float32)
    b_hid = jnp.concatenate([padb(p["b_b1a"]), padb(p["b_b1b"]),
                             padb(p["b_b2a"]), padb(p["b_b2b"]),
                             b_fin, pad3], axis=1)                     # (L, 8, HP)

    return {"w_x": w_x, "w_ctx": w_ctx, "b_ctx": b_ctx,
            "w_hid": w_hid, "w_fin": w_fin, "b_hid": b_hid}


# ---------------------------------------------------------------------------
# Pallas kernel: whole flow (all layers) for one batch tile, fully unrolled.
# ---------------------------------------------------------------------------
def _maf_kernel(x_ref, c_ref, w_x_ref, w_ctx_ref, b_ctx_ref, w_hid_ref, w_fin_ref,
                b_hid_ref, out_ref, *, L, F, HP):
    z = x_ref[...].astype(jnp.float32)            # (TB, F) running transformed value
    ctx = c_ref[...].astype(jnp.float32)          # (TB, C)
    logdet = jnp.zeros_like(z)                    # (TB, F) elementwise log|det| accum

    # Hoisted over all layers: ONE context matmul + ONE sigmoid pass for all GLU gates.
    ctx_proj = (jnp.dot(ctx, w_ctx_ref[...], preferred_element_type=jnp.float32)
                + b_ctx_ref[...])                              # (TB, 3*L*HP)
    ctx0_all = ctx_proj[:, :L * HP]                            # (TB, L*HP)
    gates_all = jax.nn.sigmoid(ctx_proj[:, L * HP:])           # (TB, 2*L*HP)

    for l in range(L):
        # MADE: initial masked linear + context add (bias b_init+b_ctx0 already folded in).
        h = (jnp.dot(z, w_x_ref[l], preferred_element_type=jnp.float32)
             + ctx0_all[:, l * HP:(l + 1) * HP])

        bh = b_hid_ref[l]                          # (8, HP): rows [b1a, b1b, b2a, b2b, b_fin]

        # two residual blocks with (precomputed) GLU context gating
        for blk in range(2):
            t = jnp.maximum(h, 0.0)
            t = (jnp.dot(t, w_hid_ref[4 * l + 2 * blk],
                         preferred_element_type=jnp.float32)
                 + bh[2 * blk:2 * blk + 1])
            t = jnp.maximum(t, 0.0)
            t = (jnp.dot(t, w_hid_ref[4 * l + 2 * blk + 1],
                         preferred_element_type=jnp.float32)
                 + bh[2 * blk + 1:2 * blk + 2])
            gate = gates_all[:, (2 * l + blk) * HP:(2 * l + blk + 1) * HP]
            h = h + t * gate

        # final masked linear -> [unconstrained_scale | shift]; "+2.0" folded into b_fin
        params = (jnp.dot(h, w_fin_ref[l], preferred_element_type=jnp.float32)
                  + bh[4:5, :2 * F])
        scale = jax.nn.sigmoid(params[:, :F]) + 1e-3
        z = scale * z + params[:, F:]
        logdet = logdet + jnp.log(scale)           # elementwise; reduce once at the end

    # epilogue: StandardNormal base log-prob + accumulated log|det| (single reductions)
    log_base = (-0.5 * jnp.sum(z * z, axis=-1, keepdims=True)
                - 0.5 * F * math.log(2.0 * math.pi))
    out_ref[...] = (log_base
                    + jnp.sum(logdet, axis=-1, keepdims=True)).astype(out_ref.dtype)


def maf_log_prob(x, condition, packed):
    """Equivalent of MAFModel.forward(x, condition) -> log_prob of shape (B,)."""
    B, F = x.shape
    _, C = condition.shape
    L, _, HP = packed["w_x"].shape

    # batch tiling: single tile for small B, 256-row parallel tiles otherwise
    MAX_TB = 256
    if B <= MAX_TB:
        TB, Bp = B, B
        xb, cb = x, condition
    else:
        TB = MAX_TB
        Bp = pl.cdiv(B, TB) * TB
        pad = Bp - B
        xb = jnp.pad(x, ((0, pad), (0, 0)))
        cb = jnp.pad(condition, ((0, pad), (0, 0)))
    nb = Bp // TB

    kernel = functools.partial(_maf_kernel, L=L, F=F, HP=HP)

    const2 = lambda b: (0, 0)
    const3 = lambda b: (0, 0, 0)
    out = pl.pallas_call(
        kernel,
        out_shape=jax.ShapeDtypeStruct((Bp, 1), jnp.float32),
        grid=(nb,),
        in_specs=[
            pl.BlockSpec((TB, F), lambda b: (b, 0)),
            pl.BlockSpec((TB, C), lambda b: (b, 0)),
            pl.BlockSpec(packed["w_x"].shape, const3),
            pl.BlockSpec(packed["w_ctx"].shape, const2),
            pl.BlockSpec(packed["b_ctx"].shape, const2),
            pl.BlockSpec(packed["w_hid"].shape, const3),
            pl.BlockSpec(packed["w_fin"].shape, const3),
            pl.BlockSpec(packed["b_hid"].shape, const3),
        ],
        out_specs=pl.BlockSpec((TB, 1), lambda b: (b, 0)),
        compiler_params=pltpu.CompilerParams(dimension_semantics=("parallel",)),
    )(xb, cb, packed["w_x"], packed["w_ctx"], packed["b_ctx"],
      packed["w_hid"], packed["w_fin"], packed["b_hid"])
    return out[:B, 0]


# ---------------------------------------------------------------------------
# Plain-JAX reference (operates on the UNPACKED parameters, for verification)
# ---------------------------------------------------------------------------
def maf_log_prob_ref(x, condition, p):
    L = p["w_init"].shape[0]
    F = x.shape[1]
    z = x.astype(jnp.float32)
    ctx = condition.astype(jnp.float32)
    logdet = jnp.zeros((x.shape[0],), jnp.float32)
    for l in range(L):
        h = z @ p["w_init"][l] + p["b_init"][l] + ctx @ p["w_ctx0"][l] + p["b_ctx0"][l]
        for blk in ("b1", "b2"):
            t = jax.nn.relu(h)
            t = t @ p[f"w_{blk}a"][l] + p[f"b_{blk}a"][l]
            t = jax.nn.relu(t)
            t = t @ p[f"w_{blk}b"][l] + p[f"b_{blk}b"][l]
            gate = jax.nn.sigmoid(ctx @ p[f"w_{blk}c"][l] + p[f"b_{blk}c"][l])
            h = h + t * gate
        out = h @ p["w_fin"][l] + p["b_fin"][l]
        us, shift = out[:, :F], out[:, F:]
        scale = jax.nn.sigmoid(us + 2.0) + 1e-3
        z = scale * z + shift
        logdet = logdet + jnp.sum(jnp.log(scale), axis=-1)
    log_base = -0.5 * jnp.sum(z * z, axis=-1) - 0.5 * F * math.log(2.0 * math.pi)
    return log_base + logdet


# TODO(synk): MAFModel.sample() (inverse autoregressive pass, sequential over features)
# is not implemented; only the forward log_prob path is kernelized.
# TODO(synk): on v5e/v6e, the packed weight slabs could be stored in bfloat16 (f32
# accumulation kept via preferred_element_type) to halve weight bytes; left in f32 here
# to match the f32 reference bit-tightly at these tiny shapes.

if __name__ == "__main__":
    # Small shapes consistent with the module's forward:
    #   x: (batch, num_inputs), condition: (batch, condition_size)
    B, num_inputs, num_hidden, num_layers, condition_size = 8, 8, 32, 3, 4

    key = jax.random.PRNGKey(0)
    kx, kc, kp = jax.random.split(key, 3)
    x = jax.random.normal(kx, (B, num_inputs), dtype=jnp.float32)
    condition = jax.random.normal(kc, (B, condition_size), dtype=jnp.float32)
    params = init_maf_params(kp, num_inputs, num_hidden, condition_size, num_layers)
    packed = pack_maf_params(params)

    log_prob = jax.block_until_ready(maf_log_prob(x, condition, packed))
    log_prob_ref = jax.block_until_ready(maf_log_prob_ref(x, condition, params))

    assert log_prob.shape == (B,)
    assert bool(jnp.all(jnp.isfinite(log_prob)))
    assert bool(jnp.allclose(log_prob, log_prob_ref, rtol=1e-2, atol=1e-2)), (
        log_prob, log_prob_ref)

    print("KERNEL_OK")
</pallas_src>

<mosaic_0001>
module attributes {stable_mosaic.version = 11 : i64} {
  func.func @_maf_kernel(%arg0: i32, %arg1: memref<8x8xf32, #tpu.memory_space<vmem>>, %arg2: memref<8x4xf32, #tpu.memory_space<vmem>>, %arg3: memref<3x8x128xf32, #tpu.memory_space<vmem>>, %arg4: memref<4x1152xf32, #tpu.memory_space<vmem>>, %arg5: memref<1x1152xf32, #tpu.memory_space<vmem>>, %arg6: memref<12x128x128xf32, #tpu.memory_space<vmem>>, %arg7: memref<3x128x16xf32, #tpu.memory_space<vmem>>, %arg8: memref<3x8x128xf32, #tpu.memory_space<vmem>>, %arg9: memref<8x1xf32, #tpu.memory_space<vmem>>) attributes {dimension_semantics = [#tpu.dimension_semantics<parallel>], iteration_bounds = array<i64: 1>, scalar_prefetch = 0 : i64, scratch_operands = 0 : i64, tpu.core_type = #tpu.core_type<tc>, window_params = [{transform_indices = @transform_0, window_bounds = array<i64: 8, 8>}, {transform_indices = @transform_1, window_bounds = array<i64: 8, 4>}, {pipeline_mode = #tpu.pipeline_mode<synchronous>, transform_indices = @transform_2, window_bounds = array<i64: 3, 8, 128>}, {pipeline_mode = #tpu.pipeline_mode<synchronous>, transform_indices = @transform_3, window_bounds = array<i64: 4, 1152>}, {pipeline_mode = #tpu.pipeline_mode<synchronous>, transform_indices = @transform_4, window_bounds = array<i64: 1, 1152>}, {pipeline_mode = #tpu.pipeline_mode<synchronous>, transform_indices = @transform_5, window_bounds = array<i64: 12, 128, 128>}, {pipeline_mode = #tpu.pipeline_mode<synchronous>, transform_indices = @transform_6, window_bounds = array<i64: 3, 128, 16>}, {pipeline_mode = #tpu.pipeline_mode<synchronous>, transform_indices = @transform_7, window_bounds = array<i64: 3, 8, 128>}, {transform_indices = @transform_8, window_bounds = array<i64: 8, 1>}]} {
    %c0 = arith.constant 0 : index
    %c0_0 = arith.constant 0 : index
    %0 = vector.load %arg1[%c0, %c0_0] : memref<8x8xf32, #tpu.memory_space<vmem>>, vector<8x8xf32>
    %c0_1 = arith.constant 0 : index
    %c0_2 = arith.constant 0 : index
    %1 = vector.load %arg2[%c0_1, %c0_2] : memref<8x4xf32, #tpu.memory_space<vmem>>, vector<8x4xf32>
    %cst = arith.constant 0.000000e+00 : f32
    %2 = vector.broadcast %cst : f32 to vector<8x8xf32>
    %c0_3 = arith.constant 0 : index
    %c0_4 = arith.constant 0 : index
    %3 = vector.load %arg4[%c0_3, %c0_4] : memref<4x1152xf32, #tpu.memory_space<vmem>>, vector<4x1152xf32>
    %cst_5 = arith.constant dense<0.000000e+00> : vector<8x1152xf32>
    %4 = tpu.matmul %1, %3, %cst_5 {dimension_numbers = #tpu.dot_dimension_numbers<[1], [0], [0], [1], [0, 0, 1, 1], [], []>} : vector<8x4xf32>, vector<4x1152xf32>, vector<8x1152xf32> -> vector<8x1152xf32>
    %c0_6 = arith.constant 0 : index
    %c0_7 = arith.constant 0 : index
    %5 = vector.load %arg5[%c0_6, %c0_7] : memref<1x1152xf32, #tpu.memory_space<vmem>>, vector<1x1152xf32>
    %6 = vector.broadcast %5 : vector<1x1152xf32> to vector<8x1152xf32>
    %7 = arith.addf %4, %6 : vector<8x1152xf32>
    %8 = vector.extract_strided_slice %7 {offsets = [0, 0], sizes = [8, 384], strides = [1, 1]} : vector<8x1152xf32> to vector<8x384xf32>
    %9 = vector.extract_strided_slice %7 {offsets = [0, 384], sizes = [8, 768], strides = [1, 1]} : vector<8x1152xf32> to vector<8x768xf32>
    %10 = arith.negf %9 : vector<8x768xf32>
    %11 = math.exp %10 : vector<8x768xf32>
    %cst_8 = arith.constant 1.000000e+00 : f32
    %12 = vector.broadcast %cst_8 : f32 to vector<8x768xf32>
    %13 = arith.addf %12, %11 : vector<8x768xf32>
    %14 = arith.divf %12, %13 : vector<8x768xf32>
    %c0_9 = arith.constant 0 : index
    %c0_10 = arith.constant 0 : index
    %c0_11 = arith.constant 0 : index
    %15 = vector.load %arg3[%c0_9, %c0_10, %c0_11] : memref<3x8x128xf32, #tpu.memory_space<vmem>>, vector<1x8x128xf32>
    %16 = vector.shape_cast %15 : vector<1x8x128xf32> to vector<8x128xf32>
    %cst_12 = arith.constant dense<0.000000e+00> : vector<8x128xf32>
    %17 = tpu.matmul %0, %16, %cst_12 {dimension_numbers = #tpu.dot_dimension_numbers<[1], [0], [0], [1], [0, 0, 1, 1], [], []>} : vector<8x8xf32>, vector<8x128xf32>, vector<8x128xf32> -> vector<8x128xf32>
    %18 = vector.extract_strided_slice %8 {offsets = [0, 0], sizes = [8, 128], strides = [1, 1]} : vector<8x384xf32> to vector<8x128xf32>
    %19 = arith.addf %17, %18 : vector<8x128xf32>
    %c0_13 = arith.constant 0 : index
    %c0_14 = arith.constant 0 : index
    %c0_15 = arith.constant 0 : index
    %20 = vector.load %arg8[%c0_13, %c0_14, %c0_15] : memref<3x8x128xf32, #tpu.memory_space<vmem>>, vector<1x8x128xf32>
    %21 = vector.shape_cast %20 : vector<1x8x128xf32> to vector<8x128xf32>
    %cst_16 = arith.constant 0.000000e+00 : f32
    %22 = vector.broadcast %cst_16 : f32 to vector<8x128xf32>
    %23 = arith.maximumf %19, %22 : vector<8x128xf32>
    %c0_17 = arith.constant 0 : index
    %c0_18 = arith.constant 0 : index
    %c0_19 = arith.constant 0 : index
    %24 = vector.load %arg6[%c0_17, %c0_18, %c0_19] : memref<12x128x128xf32, #tpu.memory_space<vmem>>, vector<1x128x128xf32>
    %25 = vector.shape_cast %24 : vector<1x128x128xf32> to vector<128x128xf32>
    %cst_20 = arith.constant dense<0.000000e+00> : vector<8x128xf32>
    %26 = tpu.matmul %23, %25, %cst_20 {dimension_numbers = #tpu.dot_dimension_numbers<[1], [0], [0], [1], [0, 0, 1, 1], [], []>} : vector<8x128xf32>, vector<128x128xf32>, vector<8x128xf32> -> vector<8x128xf32>
    %27 = vector.extract_strided_slice %21 {offsets = [0, 0], sizes = [1, 128], strides = [1, 1]} : vector<8x128xf32> to vector<1x128xf32>
    %28 = vector.broadcast %27 : vector<1x128xf32> to vector<8x128xf32>
    %29 = arith.addf %26, %28 : vector<8x128xf32>
    %cst_21 = arith.constant 0.000000e+00 : f32
    %30 = vector.broadcast %cst_21 : f32 to vector<8x128xf32>
    %31 = arith.maximumf %29, %30 : vector<8x128xf32>
    %c1 = arith.constant 1 : index
    %c0_22 = arith.constant 0 : index
    %c0_23 = arith.constant 0 : index
    %32 = vector.load %arg6[%c1, %c0_22, %c0_23] : memref<12x128x128xf32, #tpu.memory_space<vmem>>, vector<1x128x128xf32>
    %33 = vector.shape_cast %32 : vector<1x128x128xf32> to vector<128x128xf32>
    %cst_24 = arith.constant dense<0.000000e+00> : vector<8x128xf32>
    %34 = tpu.matmul %31, %33, %cst_24 {dimension_numbers = #tpu.dot_dimension_numbers<[1], [0], [0], [1], [0, 0, 1, 1], [], []>} : vector<8x128xf32>, vector<128x128xf32>, vector<8x128xf32> -> vector<8x128xf32>
    %35 = vector.extract_strided_slice %21 {offsets = [1, 0], sizes = [1, 128], strides = [1, 1]} : vector<8x128xf32> to vector<1x128xf32>
    %36 = vector.broadcast %35 : vector<1x128xf32> to vector<8x128xf32>
    %37 = arith.addf %34, %36 : vector<8x128xf32>
    %38 = vector.extract_strided_slice %14 {offsets = [0, 0], sizes = [8, 128], strides = [1, 1]} : vector<8x768xf32> to vector<8x128xf32>
    %39 = arith.mulf %37, %38 : vector<8x128xf32>
    %40 = arith.addf %19, %39 : vector<8x128xf32>
    %cst_25 = arith.constant 0.000000e+00 : f32
    %41 = vector.broadcast %cst_25 : f32 to vector<8x128xf32>
    %42 = arith.maximumf %40, %41 : vector<8x128xf32>
    %c2 = arith.constant 2 : index
    %c0_26 = arith.constant 0 : index
    %c0_27 = arith.constant 0 : index
    %43 = vector.load %arg6[%c2, %c0_26, %c0_27] : memref<12x128x128xf32, #tpu.memory_space<vmem>>, vector<1x128x128xf32>
    %44 = vector.shape_cast %43 : vector<1x128x128xf32> to vector<128x128xf32>
    %cst_28 = arith.constant dense<0.000000e+00> : vector<8x128xf32>
    %45 = tpu.matmul %42, %44, %cst_28 {dimension_numbers = #tpu.dot_dimension_numbers<[1], [0], [0], [1], [0, 0, 1, 1], [], []>} : vector<8x128xf32>, vector<128x128xf32>, vector<8x128xf32> -> vector<8x128xf32>
    %46 = vector.extract_strided_slice %21 {offsets = [2, 0], sizes = [1, 128], strides = [1, 1]} : vector<8x128xf32> to vector<1x128xf32>
    %47 = vector.broadcast %46 : vector<1x128xf32> to vector<8x128xf32>
    %48 = arith.addf %45, %47 : vector<8x128xf32>
    %cst_29 = arith.constant 0.000000e+00 : f32
    %49 = vector.broadcast %cst_29 : f32 to vector<8x128xf32>
    %50 = arith.maximumf %48, %49 : vector<8x128xf32>
    %c3 = arith.constant 3 : index
    %c0_30 = arith.constant 0 : index
    %c0_31 = arith.constant 0 : index
    %51 = vector.load %arg6[%c3, %c0_30, %c0_31] : memref<12x128x128xf32, #tpu.memory_space<vmem>>, vector<1x128x128xf32>
    %52 = vector.shape_cast %51 : vector<1x128x128xf32> to vector<128x128xf32>
    %cst_32 = arith.constant dense<0.000000e+00> : vector<8x128xf32>
    %53 = tpu.matmul %50, %52, %cst_32 {dimension_numbers = #tpu.dot_dimension_numbers<[1], [0], [0], [1], [0, 0, 1, 1], [], []>} : vector<8x128xf32>, vector<128x128xf32>, vector<8x128xf32> -> vector<8x128xf32>
    %54 = vector.extract_strided_slice %21 {offsets = [3, 0], sizes = [1, 128], strides = [1, 1]} : vector<8x128xf32> to vector<1x128xf32>
    %55 = vector.broadcast %54 : vector<1x128xf32> to vector<8x128xf32>
    %56 = arith.addf %53, %55 : vector<8x128xf32>
    %57 = vector.extract_strided_slice %14 {offsets = [0, 128], sizes = [8, 128], strides = [1, 1]} : vector<8x768xf32> to vector<8x128xf32>
    %58 = arith.mulf %56, %57 : vector<8x128xf32>
    %59 = arith.addf %40, %58 : vector<8x128xf32>
    %c0_33 = arith.constant 0 : index
    %c0_34 = arith.constant 0 : index
    %c0_35 = arith.constant 0 : index
    %60 = vector.load %arg7[%c0_33, %c0_34, %c0_35] : memref<3x128x16xf32, #tpu.memory_space<vmem>>, vector<1x128x16xf32>
    %61 = vector.shape_cast %60 : vector<1x128x16xf32> to vector<128x16xf32>
    %cst_36 = arith.constant dense<0.000000e+00> : vector<8x16xf32>
    %62 = tpu.matmul %59, %61, %cst_36 {dimension_numbers = #tpu.dot_dimension_numbers<[1], [0], [0], [1], [0, 0, 1, 1], [], []>} : vector<8x128xf32>, vector<128x16xf32>, vector<8x16xf32> -> vector<8x16xf32>
    %63 = vector.extract_strided_slice %21 {offsets = [4, 0], sizes = [1, 16], strides = [1, 1]} : vector<8x128xf32> to vector<1x16xf32>
    %64 = vector.broadcast %63 : vector<1x16xf32> to vector<8x16xf32>
    %65 = arith.addf %62, %64 : vector<8x16xf32>
    %66 = vector.extract_strided_slice %65 {offsets = [0, 0], sizes = [8, 8], strides = [1, 1]} : vector<8x16xf32> to vector<8x8xf32>
    %67 = arith.negf %66 : vector<8x8xf32>
    %68 = math.exp %67 : vector<8x8xf32>
    %cst_37 = arith.constant 1.000000e+00 : f32
    %69 = vector.broadcast %cst_37 : f32 to vector<8x8xf32>
    %70 = arith.addf %69, %68 : vector<8x8xf32>
    %71 = arith.divf %69, %70 : vector<8x8xf32>
    %cst_38 = arith.constant 1.000000e-03 : f32
    %72 = vector.broadcast %cst_38 : f32 to vector<8x8xf32>
    %73 = arith.addf %71, %72 : vector<8x8xf32>
    %74 = arith.mulf %73, %0 : vector<8x8xf32>
    %75 = vector.extract_strided_slice %65 {offsets = [0, 8], sizes = [8, 8], strides = [1, 1]} : vector<8x16xf32> to vector<8x8xf32>
    %76 = arith.addf %74, %75 : vector<8x8xf32>
    %77 = math.log %73 : vector<8x8xf32>
    %78 = arith.addf %2, %77 : vector<8x8xf32>
    %c1_39 = arith.constant 1 : index
    %c0_40 = arith.constant 0 : index
    %c0_41 = arith.constant 0 : index
    %79 = vector.load %arg3[%c1_39, %c0_40, %c0_41] : memref<3x8x128xf32, #tpu.memory_space<vmem>>, vector<1x8x128xf32>
    %80 = vector.shape_cast %79 : vector<1x8x128xf32> to vector<8x128xf32>
    %cst_42 = arith.constant dense<0.000000e+00> : vector<8x128xf32>
    %81 = tpu.matmul %76, %80, %cst_42 {dimension_numbers = #tpu.dot_dimension_numbers<[1], [0], [0], [1], [0, 0, 1, 1], [], []>} : vector<8x8xf32>, vector<8x128xf32>, vector<8x128xf32> -> vector<8x128xf32>
    %82 = vector.extract_strided_slice %8 {offsets = [0, 128], sizes = [8, 128], strides = [1, 1]} : vector<8x384xf32> to vector<8x128xf32>
    %83 = arith.addf %81, %82 : vector<8x128xf32>
    %c1_43 = arith.constant 1 : index
    %c0_44 = arith.constant 0 : index
    %c0_45 = arith.constant 0 : index
    %84 = vector.load %arg8[%c1_43, %c0_44, %c0_45] : memref<3x8x128xf32, #tpu.memory_space<vmem>>, vector<1x8x128xf32>
    %85 = vector.shape_cast %84 : vector<1x8x128xf32> to vector<8x128xf32>
    %cst_46 = arith.constant 0.000000e+00 : f32
    %86 = vector.broadcast %cst_46 : f32 to vector<8x128xf32>
    %87 = arith.maximumf %83, %86 : vector<8x128xf32>
    %c4 = arith.constant 4 : index
    %c0_47 = arith.constant 0 : index
    %c0_48 = arith.constant 0 : index
    %88 = vector.load %arg6[%c4, %c0_47, %c0_48] : memref<12x128x128xf32, #tpu.memory_space<vmem>>, vector<1x128x128xf32>
    %89 = vector.shape_cast %88 : vector<1x128x128xf32> to vector<128x128xf32>
    %cst_49 = arith.constant dense<0.000000e+00> : vector<8x128xf32>
    %90 = tpu.matmul %87, %89, %cst_49 {dimension_numbers = #tpu.dot_dimension_numbers<[1], [0], [0], [1], [0, 0, 1, 1], [], []>} : vector<8x128xf32>, vector<128x128xf32>, vector<8x128xf32> -> vector<8x128xf32>
    %91 = vector.extract_strided_slice %85 {offsets = [0, 0], sizes = [1, 128], strides = [1, 1]} : vector<8x128xf32> to vector<1x128xf32>
    %92 = vector.broadcast %91 : vector<1x128xf32> to vector<8x128xf32>
    %93 = arith.addf %90, %92 : vector<8x128xf32>
    %cst_50 = arith.constant 0.000000e+00 : f32
    %94 = vector.broadcast %cst_50 : f32 to vector<8x128xf32>
    %95 = arith.maximumf %93, %94 : vector<8x128xf32>
    %c5 = arith.constant 5 : index
    %c0_51 = arith.constant 0 : index
    %c0_52 = arith.constant 0 : index
    %96 = vector.load %arg6[%c5, %c0_51, %c0_52] : memref<12x128x128xf32, #tpu.memory_space<vmem>>, vector<1x128x128xf32>
    %97 = vector.shape_cast %96 : vector<1x128x128xf32> to vector<128x128xf32>
    %cst_53 = arith.constant dense<0.000000e+00> : vector<8x128xf32>
    %98 = tpu.matmul %95, %97, %cst_53 {dimension_numbers = #tpu.dot_dimension_numbers<[1], [0], [0], [1], [0, 0, 1, 1], [], []>} : vector<8x128xf32>, vector<128x128xf32>, vector<8x128xf32> -> vector<8x128xf32>
    %99 = vector.extract_strided_slice %85 {offsets = [1, 0], sizes = [1, 128], strides = [1, 1]} : vector<8x128xf32> to vector<1x128xf32>
    %100 = vector.broadcast %99 : vector<1x128xf32> to vector<8x128xf32>
    %101 = arith.addf %98, %100 : vector<8x128xf32>
    %102 = vector.extract_strided_slice %14 {offsets = [0, 256], sizes = [8, 128], strides = [1, 1]} : vector<8x768xf32> to vector<8x128xf32>
    %103 = arith.mulf %101, %102 : vector<8x128xf32>
    %104 = arith.addf %83, %103 : vector<8x128xf32>
    %cst_54 = arith.constant 0.000000e+00 : f32
    %105 = vector.broadcast %cst_54 : f32 to vector<8x128xf32>
    %106 = arith.maximumf %104, %105 : vector<8x128xf32>
    %c6 = arith.constant 6 : index
    %c0_55 = arith.constant 0 : index
    %c0_56 = arith.constant 0 : index
    %107 = vector.load %arg6[%c6, %c0_55, %c0_56] : memref<12x128x128xf32, #tpu.memory_space<vmem>>, vector<1x128x128xf32>
    %108 = vector.shape_cast %107 : vector<1x128x128xf32> to vector<128x128xf32>
    %cst_57 = arith.constant dense<0.000000e+00> : vector<8x128xf32>
    %109 = tpu.matmul %106, %108, %cst_57 {dimension_numbers = #tpu.dot_dimension_numbers<[1], [0], [0], [1], [0, 0, 1, 1], [], []>} : vector<8x128xf32>, vector<128x128xf32>, vector<8x128xf32> -> vector<8x128xf32>
    %110 = vector.extract_strided_slice %85 {offsets = [2, 0], sizes = [1, 128], strides = [1, 1]} : vector<8x128xf32> to vector<1x128xf32>
    %111 = vector.broadcast %110 : vector<1x128xf32> to vector<8x128xf32>
    %112 = arith.addf %109, %111 : vector<8x128xf32>
    %cst_58 = arith.constant 0.000000e+00 : f32
    %113 = vector.broadcast %cst_58 : f32 to vector<8x128xf32>
    %114 = arith.maximumf %112, %113 : vector<8x128xf32>
    %c7 = arith.constant 7 : index
    %c0_59 = arith.constant 0 : index
    %c0_60 = arith.constant 0 : index
    %115 = vector.load %arg6[%c7, %c0_59, %c0_60] : memref<12x128x128xf32, #tpu.memory_space<vmem>>, vector<1x128x128xf32>
    %116 = vector.shape_cast %115 : vector<1x128x128xf32> to vector<128x128xf32>
    %cst_61 = arith.constant dense<0.000000e+00> : vector<8x128xf32>
    %117 = tpu.matmul %114, %116, %cst_61 {dimension_numbers = #tpu.dot_dimension_numbers<[1], [0], [0], [1], [0, 0, 1, 1], [], []>} : vector<8x128xf32>, vector<128x128xf32>, vector<8x128xf32> -> vector<8x128xf32>
    %118 = vector.extract_strided_slice %85 {offsets = [3, 0], sizes = [1, 128], strides = [1, 1]} : vector<8x128xf32> to vector<1x128xf32>
    %119 = vector.broadcast %118 : vector<1x128xf32> to vector<8x128xf32>
    %120 = arith.addf %117, %119 : vector<8x128xf32>
    %121 = vector.extract_strided_slice %14 {offsets = [0, 384], sizes = [8, 128], strides = [1, 1]} : vector<8x768xf32> to vector<8x128xf32>
    %122 = arith.mulf %120, %121 : vector<8x128xf32>
    %123 = arith.addf %104, %122 : vector<8x128xf32>
    %c1_62 = arith.constant 1 : index
    %c0_63 = arith.constant 0 : index
    %c0_64 = arith.constant 0 : index
    %124 = vector.load %arg7[%c1_62, %c0_63, %c0_64] : memref<3x128x16xf32, #tpu.memory_space<vmem>>, vector<1x128x16xf32>
    %125 = vector.shape_cast %124 : vector<1x128x16xf32> to vector<128x16xf32>
    %cst_65 = arith.constant dense<0.000000e+00> : vector<8x16xf32>
    %126 = tpu.matmul %123, %125, %cst_65 {dimension_numbers = #tpu.dot_dimension_numbers<[1], [0], [0], [1], [0, 0, 1, 1], [], []>} : vector<8x128xf32>, vector<128x16xf32>, vector<8x16xf32> -> vector<8x16xf32>
    %127 = vector.extract_strided_slice %85 {offsets = [4, 0], sizes = [1, 16], strides = [1, 1]} : vector<8x128xf32> to vector<1x16xf32>
    %128 = vector.broadcast %127 : vector<1x16xf32> to vector<8x16xf32>
    %129 = arith.addf %126, %128 : vector<8x16xf32>
    %130 = vector.extract_strided_slice %129 {offsets = [0, 0], sizes = [8, 8], strides = [1, 1]} : vector<8x16xf32> to vector<8x8xf32>
    %131 = arith.negf %130 : vector<8x8xf32>
    %132 = math.exp %131 : vector<8x8xf32>
    %cst_66 = arith.constant 1.000000e+00 : f32
    %133 = vector.broadcast %cst_66 : f32 to vector<8x8xf32>
    %134 = arith.addf %133, %132 : vector<8x8xf32>
    %135 = arith.divf %133, %134 : vector<8x8xf32>
    %cst_67 = arith.constant 1.000000e-03 : f32
    %136 = vector.broadcast %cst_67 : f32 to vector<8x8xf32>
    %137 = arith.addf %135, %136 : vector<8x8xf32>
    %138 = arith.mulf %137, %76 : vector<8x8xf32>
    %139 = vector.extract_strided_slice %129 {offsets = [0, 8], sizes = [8, 8], strides = [1, 1]} : vector<8x16xf32> to vector<8x8xf32>
    %140 = arith.addf %138, %139 : vector<8x8xf32>
    %141 = math.log %137 : vector<8x8xf32>
    %142 = arith.addf %78, %141 : vector<8x8xf32>
    %c2_68 = arith.constant 2 : index
    %c0_69 = arith.constant 0 : index
    %c0_70 = arith.constant 0 : index
    %143 = vector.load %arg3[%c2_68, %c0_69, %c0_70] : memref<3x8x128xf32, #tpu.memory_space<vmem>>, vector<1x8x128xf32>
    %144 = vector.shape_cast %143 : vector<1x8x128xf32> to vector<8x128xf32>
    %cst_71 = arith.constant dense<0.000000e+00> : vector<8x128xf32>
    %145 = tpu.matmul %140, %144, %cst_71 {dimension_numbers = #tpu.dot_dimension_numbers<[1], [0], [0], [1], [0, 0, 1, 1], [], []>} : vector<8x8xf32>, vector<8x128xf32>, vector<8x128xf32> -> vector<8x128xf32>
    %146 = vector.extract_strided_slice %8 {offsets = [0, 256], sizes = [8, 128], strides = [1, 1]} : vector<8x384xf32> to vector<8x128xf32>
    %147 = arith.addf %145, %146 : vector<8x128xf32>
    %c2_72 = arith.constant 2 : index
    %c0_73 = arith.constant 0 : index
    %c0_74 = arith.constant 0 : index
    %148 = vector.load %arg8[%c2_72, %c0_73, %c0_74] : memref<3x8x128xf32, #tpu.memory_space<vmem>>, vector<1x8x128xf32>
    %149 = vector.shape_cast %148 : vector<1x8x128xf32> to vector<8x128xf32>
    %cst_75 = arith.constant 0.000000e+00 : f32
    %150 = vector.broadcast %cst_75 : f32 to vector<8x128xf32>
    %151 = arith.maximumf %147, %150 : vector<8x128xf32>
    %c8 = arith.constant 8 : index
    %c0_76 = arith.constant 0 : index
    %c0_77 = arith.constant 0 : index
    %152 = vector.load %arg6[%c8, %c0_76, %c0_77] : memref<12x128x128xf32, #tpu.memory_space<vmem>>, vector<1x128x128xf32>
    %153 = vector.shape_cast %152 : vector<1x128x128xf32> to vector<128x128xf32>
    %cst_78 = arith.constant dense<0.000000e+00> : vector<8x128xf32>
    %154 = tpu.matmul %151, %153, %cst_78 {dimension_numbers = #tpu.dot_dimension_numbers<[1], [0], [0], [1], [0, 0, 1, 1], [], []>} : vector<8x128xf32>, vector<128x128xf32>, vector<8x128xf32> -> vector<8x128xf32>
    %155 = vector.extract_strided_slice %149 {offsets = [0, 0], sizes = [1, 128], strides = [1, 1]} : vector<8x128xf32> to vector<1x128xf32>
    %156 = vector.broadcast %155 : vector<1x128xf32> to vector<8x128xf32>
    %157 = arith.addf %154, %156 : vector<8x128xf32>
    %cst_79 = arith.constant 0.000000e+00 : f32
    %158 = vector.broadcast %cst_79 : f32 to vector<8x128xf32>
    %159 = arith.maximumf %157, %158 : vector<8x128xf32>
    %c9 = arith.constant 9 : index
    %c0_80 = arith.constant 0 : index
    %c0_81 = arith.constant 0 : index
    %160 = vector.load %arg6[%c9, %c0_80, %c0_81] : memref<12x128x128xf32, #tpu.memory_space<vmem>>, vector<1x128x128xf32>
    %161 = vector.shape_cast %160 : vector<1x128x128xf32> to vector<128x128xf32>
    %cst_82 = arith.constant dense<0.000000e+00> : vector<8x128xf32>
    %162 = tpu.matmul %159, %161, %cst_82 {dimension_numbers = #tpu.dot_dimension_numbers<[1], [0], [0], [1], [0, 0, 1, 1], [], []>} : vector<8x128xf32>, vector<128x128xf32>, vector<8x128xf32> -> vector<8x128xf32>
    %163 = vector.extract_strided_slice %149 {offsets = [1, 0], sizes = [1, 128], strides = [1, 1]} : vector<8x128xf32> to vector<1x128xf32>
    %164 = vector.broadcast %163 : vector<1x128xf32> to vector<8x128xf32>
    %165 = arith.addf %162, %164 : vector<8x128xf32>
    %166 = vector.extract_strided_slice %14 {offsets = [0, 512], sizes = [8, 128], strides = [1, 1]} : vector<8x768xf32> to vector<8x128xf32>
    %167 = arith.mulf %165, %166 : vector<8x128xf32>
    %168 = arith.addf %147, %167 : vector<8x128xf32>
    %cst_83 = arith.constant 0.000000e+00 : f32
    %169 = vector.broadcast %cst_83 : f32 to vector<8x128xf32>
    %170 = arith.maximumf %168, %169 : vector<8x128xf32>
    %c10 = arith.constant 10 : index
    %c0_84 = arith.constant 0 : index
    %c0_85 = arith.constant 0 : index
    %171 = vector.load %arg6[%c10, %c0_84, %c0_85] : memref<12x128x128xf32, #tpu.memory_space<vmem>>, vector<1x128x128xf32>
    %172 = vector.shape_cast %171 : vector<1x128x128xf32> to vector<128x128xf32>
    %cst_86 = arith.constant dense<0.000000e+00> : vector<8x128xf32>
    %173 = tpu.matmul %170, %172, %cst_86 {dimension_numbers = #tpu.dot_dimension_numbers<[1], [0], [0], [1], [0, 0, 1, 1], [], []>} : vector<8x128xf32>, vector<128x128xf32>, vector<8x128xf32> -> vector<8x128xf32>
    %174 = vector.extract_strided_slice %149 {offsets = [2, 0], sizes = [1, 128], strides = [1, 1]} : vector<8x128xf32> to vector<1x128xf32>
    %175 = vector.broadcast %174 : vector<1x128xf32> to vector<8x128xf32>
    %176 = arith.addf %173, %175 : vector<8x128xf32>
    %cst_87 = arith.constant 0.000000e+00 : f32
    %177 = vector.broadcast %cst_87 : f32 to vector<8x128xf32>
    %178 = arith.maximumf %176, %177 : vector<8x128xf32>
    %c11 = arith.constant 11 : index
    %c0_88 = arith.constant 0 : index
    %c0_89 = arith.constant 0 : index
    %179 = vector.load %arg6[%c11, %c0_88, %c0_89] : memref<12x128x128xf32, #tpu.memory_space<vmem>>, vector<1x128x128xf32>
    %180 = vector.shape_cast %179 : vector<1x128x128xf32> to vector<128x128xf32>
    %cst_90 = arith.constant dense<0.000000e+00> : vector<8x128xf32>
    %181 = tpu.matmul %178, %180, %cst_90 {dimension_numbers = #tpu.dot_dimension_numbers<[1], [0], [0], [1], [0, 0, 1, 1], [], []>} : vector<8x128xf32>, vector<128x128xf32>, vector<8x128xf32> -> vector<8x128xf32>
    %182 = vector.extract_strided_slice %149 {offsets = [3, 0], sizes = [1, 128], strides = [1, 1]} : vector<8x128xf32> to vector<1x128xf32>
    %183 = vector.broadcast %182 : vector<1x128xf32> to vector<8x128xf32>
    %184 = arith.addf %181, %183 : vector<8x128xf32>
    %185 = vector.extract_strided_slice %14 {offsets = [0, 640], sizes = [8, 128], strides = [1, 1]} : vector<8x768xf32> to vector<8x128xf32>
    %186 = arith.mulf %184, %185 : vector<8x128xf32>
    %187 = arith.addf %168, %186 : vector<8x128xf32>
    %c2_91 = arith.constant 2 : index
    %c0_92 = arith.constant 0 : index
    %c0_93 = arith.constant 0 : index
    %188 = vector.load %arg7[%c2_91, %c0_92, %c0_93] : memref<3x128x16xf32, #tpu.memory_space<vmem>>, vector<1x128x16xf32>
    %189 = vector.shape_cast %188 : vector<1x128x16xf32> to vector<128x16xf32>
    %cst_94 = arith.constant dense<0.000000e+00> : vector<8x16xf32>
    %190 = tpu.matmul %187, %189, %cst_94 {dimension_numbers = #tpu.dot_dimension_numbers<[1], [0], [0], [1], [0, 0, 1, 1], [], []>} : vector<8x128xf32>, vector<128x16xf32>, vector<8x16xf32> -> vector<8x16xf32>
    %191 = vector.extract_strided_slice %149 {offsets = [4, 0], sizes = [1, 16], strides = [1, 1]} : vector<8x128xf32> to vector<1x16xf32>
    %192 = vector.broadcast %191 : vector<1x16xf32> to vector<8x16xf32>
    %193 = arith.addf %190, %192 : vector<8x16xf32>
    %194 = vector.extract_strided_slice %193 {offsets = [0, 0], sizes = [8, 8], strides = [1, 1]} : vector<8x16xf32> to vector<8x8xf32>
    %195 = arith.negf %194 : vector<8x8xf32>
    %196 = math.exp %195 : vector<8x8xf32>
    %cst_95 = arith.constant 1.000000e+00 : f32
    %197 = vector.broadcast %cst_95 : f32 to vector<8x8xf32>
    %198 = arith.addf %197, %196 : vector<8x8xf32>
    %199 = arith.divf %197, %198 : vector<8x8xf32>
    %cst_96 = arith.constant 1.000000e-03 : f32
    %200 = vector.broadcast %cst_96 : f32 to vector<8x8xf32>
    %201 = arith.addf %199, %200 : vector<8x8xf32>
    %202 = arith.mulf %201, %140 : vector<8x8xf32>
    %203 = vector.extract_strided_slice %193 {offsets = [0, 8], sizes = [8, 8], strides = [1, 1]} : vector<8x16xf32> to vector<8x8xf32>
    %204 = arith.addf %202, %203 : vector<8x8xf32>
    %205 = math.log %201 : vector<8x8xf32>
    %206 = arith.addf %142, %205 : vector<8x8xf32>
    %207 = arith.mulf %204, %204 : vector<8x8xf32>
    %cst_97 = arith.constant dense<0.000000e+00> : vector<8xf32>
    %208 = vector.multi_reduction <add>, %207, %cst_97 [1] : vector<8x8xf32> to vector<8xf32>
    %209 = vector.shape_cast %208 : vector<8xf32> to vector<8x1xf32>
    %cst_98 = arith.constant -5.000000e-01 : f32
    %210 = vector.broadcast %cst_98 : f32 to vector<8x1xf32>
    %211 = arith.mulf %210, %209 : vector<8x1xf32>
    %cst_99 = arith.constant 7.35150814 : f32
    %212 = vector.broadcast %cst_99 : f32 to vector<8x1xf32>
    %213 = arith.subf %211, %212 : vector<8x1xf32>
    %cst_100 = arith.constant dense<0.000000e+00> : vector<8xf32>
    %214 = vector.multi_reduction <add>, %206, %cst_100 [1] : vector<8x8xf32> to vector<8xf32>
    %215 = vector.shape_cast %214 : vector<8xf32> to vector<8x1xf32>
    %216 = arith.addf %213, %215 : vector<8x1xf32>
    %c0_101 = arith.constant 0 : index
    %c0_102 = arith.constant 0 : index
    %217 = vector.load %arg9[%c0_101, %c0_102] : memref<8x1xf32, #tpu.memory_space<vmem>>, vector<8x1xf32>
    tpu.vector_store %arg9[%c0_101, %c0_102], %216 {strides = array<i32>} : memref<8x1xf32, #tpu.memory_space<vmem>>, vector<8x1xf32>,
    return
  }
  func.func @transform_0(%arg0: i32) -> (i32, i32) {
    %c0_i32 = arith.constant 0 : i32
    %c0_i32_0 = arith.constant 0 : i32
    return %arg0, %c0_i32 : i32, i32
  }
  func.func @transform_1(%arg0: i32) -> (i32, i32) {
    %c0_i32 = arith.constant 0 : i32
    %c0_i32_0 = arith.constant 0 : i32
    return %arg0, %c0_i32 : i32, i32
  }
  func.func @transform_2(%arg0: i32) -> (i32, i32, i32) {
    %c0_i32 = arith.constant 0 : i32
    %c0_i32_0 = arith.constant 0 : i32
    %c0_i32_1 = arith.constant 0 : i32
    %c0_i32_2 = arith.constant 0 : i32
    return %c0_i32, %c0_i32_0, %c0_i32_1 : i32, i32, i32
  }
  func.func @transform_3(%arg0: i32) -> (i32, i32) {
    %c0_i32 = arith.constant 0 : i32
    %c0_i32_0 = arith.constant 0 : i32
    %c0_i32_1 = arith.constant 0 : i32
    return %c0_i32, %c0_i32_0 : i32, i32
  }
  func.func @transform_4(%arg0: i32) -> (i32, i32) {
    %c0_i32 = arith.constant 0 : i32
    %c0_i32_0 = arith.constant 0 : i32
    %c0_i32_1 = arith.constant 0 : i32
    return %c0_i32, %c0_i32_0 : i32, i32
  }
  func.func @transform_5(%arg0: i32) -> (i32, i32, i32) {
    %c0_i32 = arith.constant 0 : i32
    %c0_i32_0 = arith.constant 0 : i32
    %c0_i32_1 = arith.constant 0 : i32
    %c0_i32_2 = arith.constant 0 : i32
    return %c0_i32, %c0_i32_0, %c0_i32_1 : i32, i32, i32
  }
  func.func @transform_6(%arg0: i32) -> (i32, i32, i32) {
    %c0_i32 = arith.constant 0 : i32
    %c0_i32_0 = arith.constant 0 : i32
    %c0_i32_1 = arith.constant 0 : i32
    %c0_i32_2 = arith.constant 0 : i32
    return %c0_i32, %c0_i32_0, %c0_i32_1 : i32, i32, i32
  }
  func.func @transform_7(%arg0: i32) -> (i32, i32, i32) {
    %c0_i32 = arith.constant 0 : i32
    %c0_i32_0 = arith.constant 0 : i32
    %c0_i32_1 = arith.constant 0 : i32
    %c0_i32_2 = arith.constant 0 : i32
    return %c0_i32, %c0_i32_0, %c0_i32_1 : i32, i32, i32
  }
  func.func @transform_8(%arg0: i32) -> (i32, i32) {
    %c0_i32 = arith.constant 0 : i32
    %c0_i32_0 = arith.constant 0 : i32
    return %arg0, %c0_i32 : i32, i32
  }
}

</mosaic_0001>

<llo_original>
// kernel: tpu_custom_call.1
$region0: #{tpu_custom_call.1}
  #allocation0 [shape = 'u32[]', space=smem, size = 0x4, offset = 0x4, fixed_abs, tag = 'smem constant byte address 0x4 - core index']
  #allocation1 [shape = 'u32[72,128]{1,0:T(1,128)}', space=vmem, size = 0x9000, scoped, tag = 'internal scratch']
  %s0 = inlined_call_operand.vmem [shape: f32[8,8], index: 0, kind: input, shape index: {}]
  %s1 = inlined_call_operand.vmem [shape: f32[8,4], index: 1, kind: input, shape index: {}]
  %s2 = inlined_call_operand.vmem [shape: f32[3,8,128], index: 2, kind: input, shape index: {}]
  %s3 = inlined_call_operand.vmem [shape: f32[4,1152], index: 3, kind: input, shape index: {}]
  %s4 = inlined_call_operand.vmem [shape: f32[1,1152], index: 4, kind: input, shape index: {}]
  %s5 = inlined_call_operand.hbm [shape: f32[12,128,128], index: 5, kind: input, shape index: {}]
  %s6 = inlined_call_operand.vmem [shape: f32[3,128,16], index: 6, kind: input, shape index: {}]
  %s7 = inlined_call_operand.vmem [shape: f32[3,8,128], index: 7, kind: input, shape index: {}]
  %s8 = inlined_call_operand.vmem [shape: f32[8,1], index: 8, kind: output, shape index: {}]
  %s9 = sld [smem:[#allocation0]]
  $region46: #{tpu_custom_call.1} parent=0
    _
  %s11 = ssub.s32 1, %s9
  %s12 = scalar_select 0, %s11, %s9
  $region1: #{tpu_custom_call.1} parent=0
    #allocation2 [shape = 'u8[786432]{0}', space=vmem, size = 0xc0000, scoped, tag = 'input window, operand 5, single buffered']
    #allocation3 [shape = 's32[1]{0}', space=sflag, size = 0x4, scoped, tag = 'scoped memory for tpu_custom_call.1']
    %13 = vsyncpa [#allocation3], 0
    // Predicated region
    $region2: #{tpu_custom_call.1} parent=1 // pred_check
      _
    $region3: #{tpu_custom_call.1} parent=1 // pred_check_branch
      %15 = sbr.rel (0) target = $region5
    $region4: #{tpu_custom_call.1} parent=1 // pred_region
      _
    $region5: #{tpu_custom_call.1} parent=1 // pred_fallthru
      _
    // Predicated region
    $region6: #{tpu_custom_call.1} parent=1 // pred_check
      _
    $region7: #{tpu_custom_call.1} parent=1 // pred_check_branch
      %17 = sbr.rel (0) target = $region9
    $region8: #{tpu_custom_call.1} parent=1 // pred_region
      _
    $region9: #{tpu_custom_call.1} parent=1 // pred_fallthru
      _
    // Predicated region
    $region10: #{tpu_custom_call.1} parent=1 // pred_check
      _
    $region11: #{tpu_custom_call.1} parent=1 // pred_check_branch
      %19 = sbr.rel (0) target = $region13
    $region12: #{tpu_custom_call.1} parent=1 // pred_region
      _
    $region13: #{tpu_custom_call.1} parent=1 // pred_fallthru
      _
    // Predicated region
    $region14: #{tpu_custom_call.1} parent=1 // pred_check
      _
    $region15: #{tpu_custom_call.1} parent=1 // pred_check_branch
      %21 = sbr.rel (0) target = $region17
    $region16: #{tpu_custom_call.1} parent=1 // pred_region
      _
    $region17: #{tpu_custom_call.1} parent=1 // pred_fallthru
      _
    // Predicated region
    $region18: #{tpu_custom_call.1} parent=1 // pred_check
      _
    $region19: #{tpu_custom_call.1} parent=1 // pred_check_branch
      %23 = sbr.rel (0) target = $region21
    $region20: #{tpu_custom_call.1} parent=1 // pred_region
      _
    $region21: #{tpu_custom_call.1} parent=1 // pred_fallthru
      _
    // Predicated region
    $region22: #{tpu_custom_call.1} parent=1 // pred_check
      _
    $region23: #{tpu_custom_call.1} parent=1 // pred_check_branch
      %25 = sbr.rel (0) target = $region25
    $region24: #{tpu_custom_call.1} parent=1 // pred_region
      %27 = vsyncadd [#allocation3], 0
      %s28 = sshll.u32 %s5, 4
      %s29 = int_to_ptr.hbm [resolvable:$true] %s28
      %s30 = sshll.u32 [#allocation2], 4
      %s31 = int_to_ptr.vmem [resolvable:$true] %s30
      %36 = dma.hbm_to_vmem [thread:$0]  %s29, 24576, %s31, [#allocation3], 128, 128, 8
    $region25: #{tpu_custom_call.1} parent=1 // pred_fallthru
      _
    // Predicated region
    $region26: #{tpu_custom_call.1} parent=1 // pred_check
      _
    $region27: #{tpu_custom_call.1} parent=1 // pred_check_branch
      %38 = sbr.rel (0) target = $region29
    $region28: #{tpu_custom_call.1} parent=1 // pred_region
      _
    $region29: #{tpu_custom_call.1} parent=1 // pred_fallthru
      _
    // Predicated region
    $region30: #{tpu_custom_call.1} parent=1 // pred_check
      _
    $region31: #{tpu_custom_call.1} parent=1 // pred_check_branch
      %40 = sbr.rel (0) target = $region33
    $region32: #{tpu_custom_call.1} parent=1 // pred_region
      _
    $region33: #{tpu_custom_call.1} parent=1 // pred_fallthru
      _
    // Predicated region
    $region34: #{tpu_custom_call.1} parent=1 // pred_check
      _
    $region35: #{tpu_custom_call.1} parent=1 // pred_check_branch
      %42 = sbr.rel (0) target = $region37
    $region36: #{tpu_custom_call.1} parent=1 // pred_region
      %44 = dma.done [#allocation3], 24576
    $region37: #{tpu_custom_call.1} parent=1 // pred_fallthru
      _
    %v45 = vld [vmem:[%s0] sm:$0xff]
    %v46 = vld [vmem:[%s1] sm:$0xff]
    %v47 = vld [vmem:[%s3] sm:$0xff]
    %v48 = vld [vmem:[%s3 + $0x8] sm:$0xff]
    %v49 = vld [vmem:[%s3 + $0x10] sm:$0xff]
    %v50 = vld [vmem:[%s3 + $0x18] sm:$0xff]
    %v51 = vld [vmem:[%s3 + $0x20] sm:$0xf]
    %v52 = vld [vmem:[%s4] sm:$0xff]
    %v53 = vld [vmem:[%s4 + $0x8] sm:$0x1]
    %v56 = vperm.slane %v52, 0
    %v57 = vperm.slane %v52, 1
    %v58 = vperm.slane %v52, 2
    %v59 = vperm.slane %v52, 3
    %v60 = vperm.slane %v52, 4
    %v61 = vperm.slane %v52, 5
    %v62 = vperm.slane %v52, 6
    %v63 = vperm.slane %v52, 7
    %v64 = vperm.slane %v53, 0
    %79 = vst [vmem:[#allocation1] ss:$2 sm:$0xff] %v47
    %s80 = scalar_lea.vmem [#allocation1], 16
    %81 = vst [vmem:[%s80] ss:$2 sm:$0xff] %v48
    %s82 = scalar_lea.vmem [#allocation1], 32
    %83 = vst [vmem:[%s82] ss:$2 sm:$0xff] %v49
    %s84 = scalar_lea.vmem [#allocation1], 48
    %85 = vst [vmem:[%s84] ss:$2 sm:$0xff] %v50
    %v86 = vld.sshfl [vmem:[#allocation1] sm:$0xff pattern:$0x75316420]
    %v87 = vld.sshfl [vmem:[#allocation1 + $0x8] sm:$0xff pattern:$0x75316420]
    %v88 = vld.sshfl [vmem:[#allocation1 + $0x10] sm:$0xff pattern:$0x75316420]
    %v89 = vld.sshfl [vmem:[#allocation1 + $0x18] sm:$0xff pattern:$0x75316420]
    %v90 = vld.sshfl [vmem:[#allocation1 + $0x20] sm:$0xff pattern:$0x75316420]
    %v91 = vld.sshfl [vmem:[#allocation1 + $0x28] sm:$0xff pattern:$0x75316420]
    %v92 = vld.sshfl [vmem:[#allocation1 + $0x30] sm:$0xff pattern:$0x75316420]
    %v93 = vld.sshfl [vmem:[#allocation1 + $0x38] sm:$0xff pattern:$0x75316420]
    %94 = vst [vmem:[#allocation1] ss:$2 sm:$0xff] %v51
    %v95 = vld.sshfl [vmem:[#allocation1] sm:$0xff pattern:$0x75316420]
    %vm96 = vcmask 31744
    %v98 = vsel %vm96, %v46, 0
    %vm100 = vcmask 1043456
    %v101 = vsel %vm100, %v86, 0
    %v103 = vsel %vm100, %v87, 0
    %v105 = vsel %vm100, %v88, 0
    %v107 = vsel %vm100, %v89, 0
    %v109 = vsel %vm100, %v90, 0
    %v111 = vsel %vm100, %v91, 0
    %v113 = vsel %vm100, %v92, 0
    %v115 = vsel %vm100, %v93, 0
    %v117 = vsel %vm100, %v95, 0
    %119 = vmatpush.msra.mxu0 0.0
    %120 = vmatpush.msra.mxu0 0.0
    %121 = vmatpush.msra.mxu0 0.0
    %122 = vmatpush.msra.mxu0 0.0
    %123 = vmatpush.msra.mxu0 0.0
    %124 = vmatpush.msra.mxu0 0.0
    %125 = vmatpush.msra.mxu0 0.0
    %126 = vmatpush.msra.mxu0 0.0
    %127 = vmatpush.msra.mxu0 0.0
    %128 = vmatpush.msra.mxu0 0.0
    %129 = vmatpush.msra.mxu0 0.0
    %130 = vmatpush.msra.mxu0 0.0
    %131 = vmatpush.msra.mxu0 0.0
    %132 = vmatpush.msra.mxu0 0.0
    %133 = vmatpush.msra.mxu0 0.0
    %134 = vmatpush.msra.mxu0 %v101
    %135 = vmatmul.f32.gmra.mxu0 %v98
    %v136 = vpop.f32.mrf.mxu0
    %v137 = vadd.f32 %v56, %v136
    %138 = vdwg.mxu0
    %139 = vmatpush.msra.mxu0 0.0
    %140 = vmatpush.msra.mxu0 0.0
    %141 = vmatpush.msra.mxu0 0.0
    %142 = vmatpush.msra.mxu0 0.0
    %143 = vmatpush.msra.mxu0 0.0
    %144 = vmatpush.msra.mxu0 0.0
    %145 = vmatpush.msra.mxu0 0.0
    %146 = vmatpush.msra.mxu0 0.0
    %147 = vmatpush.msra.mxu0 0.0
    %148 = vmatpush.msra.mxu0 0.0
    %149 = vmatpush.msra.mxu0 0.0
    %150 = vmatpush.msra.mxu0 0.0
    %151 = vmatpush.msra.mxu0 0.0
    %152 = vmatpush.msra.mxu0 0.0
    %153 = vmatpush.msra.mxu0 0.0
    %154 = vmatpush.msra.mxu0 %v103
    %155 = vmatmul.f32.gmra.mxu0 %v98
    %v156 = vpop.f32.mrf.mxu0
    %v157 = vadd.f32 %v57, %v156
    %158 = vdwg.mxu0
    %159 = vmatpush.msra.mxu0 0.0
    %160 = vmatpush.msra.mxu0 0.0
    %161 = vmatpush.msra.mxu0 0.0
    %162 = vmatpush.msra.mxu0 0.0
    %163 = vmatpush.msra.mxu0 0.0
    %164 = vmatpush.msra.mxu0 0.0
    %165 = vmatpush.msra.mxu0 0.0
    %166 = vmatpush.msra.mxu0 0.0
    %167 = vmatpush.msra.mxu0 0.0
    %168 = vmatpush.msra.mxu0 0.0
    %169 = vmatpush.msra.mxu0 0.0
    %170 = vmatpush.msra.mxu0 0.0
    %171 = vmatpush.msra.mxu0 0.0
    %172 = vmatpush.msra.mxu0 0.0
    %173 = vmatpush.msra.mxu0 0.0
    %174 = vmatpush.msra.mxu0 %v105
    %175 = vmatmul.f32.gmra.mxu0 %v98
    %v176 = vpop.f32.mrf.mxu0
    %v177 = vadd.f32 %v58, %v176
    %178 = vdwg.mxu0
    %179 = vmatpush.msra.mxu0 0.0
    %180 = vmatpush.msra.mxu0 0.0
    %181 = vmatpush.msra.mxu0 0.0
    %182 = vmatpush.msra.mxu0 0.0
    %183 = vmatpush.msra.mxu0 0.0
    %184 = vmatpush.msra.mxu0 0.0
    %185 = vmatpush.msra.mxu0 0.0
    %186 = vmatpush.msra.mxu0 0.0
    %187 = vmatpush.msra.mxu0 0.0
    %188 = vmatpush.msra.mxu0 0.0
    %189 = vmatpush.msra.mxu0 0.0
    %190 = vmatpush.msra.mxu0 0.0
    %191 = vmatpush.msra.mxu0 0.0
    %192 = vmatpush.msra.mxu0 0.0
    %193 = vmatpush.msra.mxu0 0.0
    %194 = vmatpush.msra.mxu0 %v107
    %195 = vmatmul.f32.gmra.mxu0 %v98
    %v196 = vpop.f32.mrf.mxu0
    %v197 = vadd.f32 %v59, %v196
    %198 = vdwg.mxu0
    %199 = vmatpush.msra.mxu0 0.0
    %200 = vmatpush.msra.mxu0 0.0
    %201 = vmatpush.msra.mxu0 0.0
    %202 = vmatpush.msra.mxu0 0.0
    %203 = vmatpush.msra.mxu0 0.0
    %204 = vmatpush.msra.mxu0 0.0
    %205 = vmatpush.msra.mxu0 0.0
    %206 = vmatpush.msra.mxu0 0.0
    %207 = vmatpush.msra.mxu0 0.0
    %208 = vmatpush.msra.mxu0 0.0
    %209 = vmatpush.msra.mxu0 0.0
    %210 = vmatpush.msra.mxu0 0.0
    %211 = vmatpush.msra.mxu0 0.0
    %212 = vmatpush.msra.mxu0 0.0
    %213 = vmatpush.msra.mxu0 0.0
    %214 = vmatpush.msra.mxu0 %v109
    %215 = vmatmul.f32.gmra.mxu0 %v98
    %v216 = vpop.f32.mrf.mxu0
    %v217 = vadd.f32 %v60, %v216
    %218 = vdwg.mxu0
    %219 = vmatpush.msra.mxu0 0.0
    %220 = vmatpush.msra.mxu0 0.0
    %221 = vmatpush.msra.mxu0 0.0
    %222 = vmatpush.msra.mxu0 0.0
    %223 = vmatpush.msra.mxu0 0.0
    %224 = vmatpush.msra.mxu0 0.0
    %225 = vmatpush.msra.mxu0 0.0
    %226 = vmatpush.msra.mxu0 0.0
    %227 = vmatpush.msra.mxu0 0.0
    %228 = vmatpush.msra.mxu0 0.0
    %229 = vmatpush.msra.mxu0 0.0
    %230 = vmatpush.msra.mxu0 0.0
    %231 = vmatpush.msra.mxu0 0.0
    %232 = vmatpush.msra.mxu0 0.0
    %233 = vmatpush.msra.mxu0 0.0
    %234 = vmatpush.msra.mxu0 %v111
    %235 = vmatmul.f32.gmra.mxu0 %v98
    %v236 = vpop.f32.mrf.mxu0
    %v237 = vadd.f32 %v61, %v236
    %238 = vdwg.mxu0
    %239 = vmatpush.msra.mxu0 0.0
    %240 = vmatpush.msra.mxu0 0.0
    %241 = vmatpush.msra.mxu0 0.0
    %242 = vmatpush.msra.mxu0 0.0
    %243 = vmatpush.msra.mxu0 0.0
    %244 = vmatpush.msra.mxu0 0.0
    %245 = vmatpush.msra.mxu0 0.0
    %246 = vmatpush.msra.mxu0 0.0
    %247 = vmatpush.msra.mxu0 0.0
    %248 = vmatpush.msra.mxu0 0.0
    %249 = vmatpush.msra.mxu0 0.0
    %250 = vmatpush.msra.mxu0 0.0
    %251 = vmatpush.msra.mxu0 0.0
    %252 = vmatpush.msra.mxu0 0.0
    %253 = vmatpush.msra.mxu0 0.0
    %254 = vmatpush.msra.mxu0 %v113
    %255 = vmatmul.f32.gmra.mxu0 %v98
    %v256 = vpop.f32.mrf.mxu0
    %v257 = vadd.f32 %v62, %v256
    %258 = vdwg.mxu0
    %259 = vmatpush.msra.mxu0 0.0
    %260 = vmatpush.msra.mxu0 0.0
    %261 = vmatpush.msra.mxu0 0.0
    %262 = vmatpush.msra.mxu0 0.0
    %263 = vmatpush.msra.mxu0 0.0
    %264 = vmatpush.msra.mxu0 0.0
    %265 = vmatpush.msra.mxu0 0.0
    %266 = vmatpush.msra.mxu0 0.0
    %267 = vmatpush.msra.mxu0 0.0
    %268 = vmatpush.msra.mxu0 0.0
    %269 = vmatpush.msra.mxu0 0.0
    %270 = vmatpush.msra.mxu0 0.0
    %271 = vmatpush.msra.mxu0 0.0
    %272 = vmatpush.msra.mxu0 0.0
    %273 = vmatpush.msra.mxu0 0.0
    %274 = vmatpush.msra.mxu0 %v115
    %275 = vmatmul.f32.gmra.mxu0 %v98
    %v276 = vpop.f32.mrf.mxu0
    %v277 = vadd.f32 %v63, %v276
    %278 = vdwg.mxu0
    %279 = vmatpush.msra.mxu0 0.0
    %280 = vmatpush.msra.mxu0 0.0
    %281 = vmatpush.msra.mxu0 0.0
    %282 = vmatpush.msra.mxu0 0.0
    %283 = vmatpush.msra.mxu0 0.0
    %284 = vmatpush.msra.mxu0 0.0
    %285 = vmatpush.msra.mxu0 0.0
    %286 = vmatpush.msra.mxu0 0.0
    %287 = vmatpush.msra.mxu0 0.0
    %288 = vmatpush.msra.mxu0 0.0
    %289 = vmatpush.msra.mxu0 0.0
    %290 = vmatpush.msra.mxu0 0.0
    %291 = vmatpush.msra.mxu0 0.0
    %292 = vmatpush.msra.mxu0 0.0
    %293 = vmatpush.msra.mxu0 0.0
    %294 = vmatpush.msra.mxu0 %v117
    %295 = vmatmul.f32.gmra.mxu0 %v98
    %v296 = vpop.f32.mrf.mxu0
    %v297 = vadd.f32 %v64, %v296
    %298 = vdwg.mxu0
    %v299 = vxor.u32 %v197, 2147483648
    %v300 = vxor.u32 %v217, 2147483648
    %v301 = vxor.u32 %v237, 2147483648
    %v302 = vxor.u32 %v257, 2147483648
    %v303 = vxor.u32 %v277, 2147483648
    %v304 = vxor.u32 %v297, 2147483648
    %v305 = vmul.f32 %v299, 1.442695
    %v306 = vpow.pop %v305
    %v307 = vmul.f32 %v300, 1.442695
    %v308 = vpow.pop %v307
    %v309 = vmul.f32 %v301, 1.442695
    %v310 = vpow.pop %v309
    %v311 = vmul.f32 %v302, 1.442695
    %v312 = vpow.pop %v311
    %v313 = vmul.f32 %v303, 1.442695
    %v314 = vpow.pop %v313
    %v315 = vmul.f32 %v304, 1.442695
    %v316 = vpow.pop %v315
    %v317 = vadd.f32 %v306, 1.0
    %v318 = vadd.f32 %v308, 1.0
    %v319 = vadd.f32 %v310, 1.0
    %v320 = vadd.f32 %v312, 1.0
    %v321 = vadd.f32 %v314, 1.0
    %v322 = vadd.f32 %v316, 1.0
    %v323 = vrcp.pop %v317
    %v324 = vmul.f32 %v317, %v323
    %v325 = vsub.f32 1.0, %v324
    %v326 = vmul.f32 %v323, %v325
    %v327 = vadd.f32 %v323, %v326
    %vm328 = vweird.f32 %v317
    %vm329 = vweird.f32 %v323
    %vm330 = vmor %vm328, %vm329
    %v331 = vsel %vm330, %v323, %v327
    %v332 = vand.u32 2147483647, %v317
    %vm333 = vcmp.eq.f32.partialorder %v332, 8.507059e+37
    %v334 = vand.u32 %v317, 2147483648
    %v335 = vor.u32 1.1754944e-38, %v334
    %v336 = vsel %vm333, %v335, %v331
    %v337 = vmul.f32 1.0, %v336
    %v338 = vrcp.pop %v318
    %v339 = vmul.f32 %v318, %v338
    %v340 = vsub.f32 1.0, %v339
    %v341 = vmul.f32 %v338, %v340
    %v342 = vadd.f32 %v338, %v341
    %vm343 = vweird.f32 %v318
    %vm344 = vweird.f32 %v338
    %vm345 = vmor %vm343, %vm344
    %v346 = vsel %vm345, %v338, %v342
    %v347 = vand.u32 2147483647, %v318
    %vm348 = vcmp.eq.f32.partialorder %v347, 8.507059e+37
    %v349 = vand.u32 %v318, 2147483648
    %v350 = vor.u32 1.1754944e-38, %v349
    %v351 = vsel %vm348, %v350, %v346
    %v352 = vmul.f32 1.0, %v351
    %v353 = vrcp.pop %v319
    %v354 = vmul.f32 %v319, %v353
    %v355 = vsub.f32 1.0, %v354
    %v356 = vmul.f32 %v353, %v355
    %v357 = vadd.f32 %v353, %v356
    %vm358 = vweird.f32 %v319
    %vm359 = vweird.f32 %v353
    %vm360 = vmor %vm358, %vm359
    %v361 = vsel %vm360, %v353, %v357
    %v362 = vand.u32 2147483647, %v319
    %vm363 = vcmp.eq.f32.partialorder %v362, 8.507059e+37
    %v364 = vand.u32 %v319, 2147483648
    %v365 = vor.u32 1.1754944e-38, %v364
    %v366 = vsel %vm363, %v365, %v361
    %v367 = vmul.f32 1.0, %v366
    %v368 = vrcp.pop %v320
    %v369 = vmul.f32 %v320, %v368
    %v370 = vsub.f32 1.0, %v369
    %v371 = vmul.f32 %v368, %v370
    %v372 = vadd.f32 %v368, %v371
    %vm373 = vweird.f32 %v320
    %vm374 = vweird.f32 %v368
    %vm375 = vmor %vm373, %vm374
    %v376 = vsel %vm375, %v368, %v372
    %v377 = vand.u32 2147483647, %v320
    %vm378 = vcmp.eq.f32.partialorder %v377, 8.507059e+37
    %v379 = vand.u32 %v320, 2147483648
    %v380 = vor.u32 1.1754944e-38, %v379
    %v381 = vsel %vm378, %v380, %v376
    %v382 = vmul.f32 1.0, %v381
    %v383 = vrcp.pop %v321
    %v384 = vmul.f32 %v321, %v383
    %v385 = vsub.f32 1.0, %v384
    %v386 = vmul.f32 %v383, %v385
    %v387 = vadd.f32 %v383, %v386
    %vm388 = vweird.f32 %v321
    %vm389 = vweird.f32 %v383
    %vm390 = vmor %vm388, %vm389
    %v391 = vsel %vm390, %v383, %v387
    %v392 = vand.u32 2147483647, %v321
    %vm393 = vcmp.eq.f32.partialorder %v392, 8.507059e+37
    %v394 = vand.u32 %v321, 2147483648
    %v395 = vor.u32 1.1754944e-38, %v394
    %v396 = vsel %vm393, %v395, %v391
    %v397 = vmul.f32 1.0, %v396
    %v398 = vrcp.pop %v322
    %v399 = vmul.f32 %v322, %v398
    %v400 = vsub.f32 1.0, %v399
    %v401 = vmul.f32 %v398, %v400
    %v402 = vadd.f32 %v398, %v401
    %vm403 = vweird.f32 %v322
    %vm404 = vweird.f32 %v398
    %vm405 = vmor %vm403, %vm404
    %v406 = vsel %vm405, %v398, %v402
    %v407 = vand.u32 2147483647, %v322
    %vm408 = vcmp.eq.f32.partialorder %v407, 8.507059e+37
    %v409 = vand.u32 %v322, 2147483648
    %v410 = vor.u32 1.1754944e-38, %v409
    %v411 = vsel %vm408, %v410, %v406
    %v412 = vmul.f32 1.0, %v411
    %v413 = vld [vmem:[%s2] sm:$0xff]
    %vm414 = vcmask 64512
    %v416 = vsel %vm414, %v45, 0
    %418 = vmatpush.msra.mxu0 0.0
    %419 = vmatpush.msra.mxu0 0.0
    %420 = vmatpush.msra.mxu0 0.0
    %421 = vmatpush.msra.mxu0 0.0
    %422 = vmatpush.msra.mxu0 0.0
    %423 = vmatpush.msra.mxu0 0.0
    %424 = vmatpush.msra.mxu0 0.0
    %425 = vmatpush.msra.mxu0 0.0
    %426 = vmatpush.msra.mxu0 0.0
    %427 = vmatpush.msra.mxu0 0.0
    %428 = vmatpush.msra.mxu0 0.0
    %429 = vmatpush.msra.mxu0 0.0
    %430 = vmatpush.msra.mxu0 0.0
    %431 = vmatpush.msra.mxu0 0.0
    %432 = vmatpush.msra.mxu0 0.0
    %433 = vmatpush.msra.mxu0 %v413
    %434 = vmatmul.f32.gmra.mxu0 %v416
    %v435 = vpop.f32.mrf.mxu0
    %v436 = vadd.f32 %v137, %v435
    %437 = vdwg.mxu0
    %v438 = vld [vmem:[%s7] sm:$0xff]
    %v439 = vmax.f32 %v436, 0.0
    %v440 = vld [vmem:[#allocation2] sm:$0xff]
    %v441 = vld [vmem:[#allocation2 + $0x8] sm:$0xff]
    %v442 = vld [vmem:[#allocation2 + $0x10] sm:$0xff]
    %v443 = vld [vmem:[#allocation2 + $0x18] sm:$0xff]
    %v444 = vld [vmem:[#allocation2 + $0x20] sm:$0xff]
    %v445 = vld [vmem:[#allocation2 + $0x28] sm:$0xff]
    %v446 = vld [vmem:[#allocation2 + $0x30] sm:$0xff]
    %v447 = vld [vmem:[#allocation2 + $0x38] sm:$0xff]
    %v448 = vld [vmem:[#allocation2 + $0x40] sm:$0xff]
    %v449 = vld [vmem:[#allocation2 + $0x48] sm:$0xff]
    %v450 = vld [vmem:[#allocation2 + $0x50] sm:$0xff]
    %v451 = vld [vmem:[#allocation2 + $0x58] sm:$0xff]
    %v452 = vld [vmem:[#allocation2 + $0x60] sm:$0xff]
    %v453 = vld [vmem:[#allocation2 + $0x68] sm:$0xff]
    %v454 = vld [vmem:[#allocation2 + $0x70] sm:$0xff]
    %v455 = vld [vmem:[#allocation2 + $0x78] sm:$0xff]
    %v456 = vperm.slane %v438, 0
    %457 = vmatpush.msra.mxu0 %v455
    %458 = vmatpush.msra.mxu0 %v454
    %459 = vmatpush.msra.mxu0 %v453
    %460 = vmatpush.msra.mxu0 %v452
    %461 = vmatpush.msra.mxu0 %v451
    %462 = vmatpush.msra.mxu0 %v450
    %463 = vmatpush.msra.mxu0 %v449
    %464 = vmatpush.msra.mxu0 %v448
    %465 = vmatpush.msra.mxu0 %v447
    %466 = vmatpush.msra.mxu0 %v446
    %467 = vmatpush.msra.mxu0 %v445
    %468 = vmatpush.msra.mxu0 %v444
    %469 = vmatpush.msra.mxu0 %v443
    %470 = vmatpush.msra.mxu0 %v442
    %471 = vmatpush.msra.mxu0 %v441
    %472 = vmatpush.msra.mxu0 %v440
    %473 = vmatmul.f32.gmra.mxu0 %v439
    %v474 = vpop.f32.mrf.mxu0
    %v475 = vadd.f32 %v456, %v474
    %476 = vdwg.mxu0
    %v477 = vmax.f32 %v475, 0.0
    %s478 = scalar_lea.vmem [#allocation2], 128
    %v479 = vld [vmem:[%s478] sm:$0xff]
    %v480 = vld [vmem:[%s478 + $0x8] sm:$0xff]
    %v481 = vld [vmem:[%s478 + $0x10] sm:$0xff]
    %v482 = vld [vmem:[%s478 + $0x18] sm:$0xff]
    %v483 = vld [vmem:[%s478 + $0x20] sm:$0xff]
    %v484 = vld [vmem:[%s478 + $0x28] sm:$0xff]
    %v485 = vld [vmem:[%s478 + $0x30] sm:$0xff]
    %v486 = vld [vmem:[%s478 + $0x38] sm:$0xff]
    %v487 = vld [vmem:[%s478 + $0x40] sm:$0xff]
    %v488 = vld [vmem:[%s478 + $0x48] sm:$0xff]
    %v489 = vld [vmem:[%s478 + $0x50] sm:$0xff]
    %v490 = vld [vmem:[%s478 + $0x58] sm:$0xff]
    %v491 = vld [vmem:[%s478 + $0x60] sm:$0xff]
    %v492 = vld [vmem:[%s478 + $0x68] sm:$0xff]
    %v493 = vld [vmem:[%s478 + $0x70] sm:$0xff]
    %v494 = vld [vmem:[%s478 + $0x78] sm:$0xff]
    %v495 = vperm.slane %v438, 1
    %496 = vmatpush.msra.mxu0 %v494
    %497 = vmatpush.msra.mxu0 %v493
    %498 = vmatpush.msra.mxu0 %v492
    %499 = vmatpush.msra.mxu0 %v491
    %500 = vmatpush.msra.mxu0 %v490
    %501 = vmatpush.msra.mxu0 %v489
    %502 = vmatpush.msra.mxu0 %v488
    %503 = vmatpush.msra.mxu0 %v487
    %504 = vmatpush.msra.mxu0 %v486
    %505 = vmatpush.msra.mxu0 %v485
    %506 = vmatpush.msra.mxu0 %v484
    %507 = vmatpush.msra.mxu0 %v483
    %508 = vmatpush.msra.mxu0 %v482
    %509 = vmatpush.msra.mxu0 %v481
    %510 = vmatpush.msra.mxu0 %v480
    %511 = vmatpush.msra.mxu0 %v479
    %512 = vmatmul.f32.gmra.mxu0 %v477
    %v513 = vpop.f32.mrf.mxu0
    %v514 = vadd.f32 %v495, %v513
    %515 = vdwg.mxu0
    %v516 = vmul.f32 %v514, %v337
    %v517 = vadd.f32 %v436, %v516
    %v518 = vmax.f32 %v517, 0.0
    %s519 = scalar_lea.vmem [#allocation2], 256
    %v520 = vld [vmem:[%s519] sm:$0xff]
    %v521 = vld [vmem:[%s519 + $0x8] sm:$0xff]
    %v522 = vld [vmem:[%s519 + $0x10] sm:$0xff]
    %v523 = vld [vmem:[%s519 + $0x18] sm:$0xff]
    %v524 = vld [vmem:[%s519 + $0x20] sm:$0xff]
    %v525 = vld [vmem:[%s519 + $0x28] sm:$0xff]
    %v526 = vld [vmem:[%s519 + $0x30] sm:$0xff]
    %v527 = vld [vmem:[%s519 + $0x38] sm:$0xff]
    %v528 = vld [vmem:[%s519 + $0x40] sm:$0xff]
    %v529 = vld [vmem:[%s519 + $0x48] sm:$0xff]
    %v530 = vld [vmem:[%s519 + $0x50] sm:$0xff]
    %v531 = vld [vmem:[%s519 + $0x58] sm:$0xff]
    %v532 = vld [vmem:[%s519 + $0x60] sm:$0xff]
    %v533 = vld [vmem:[%s519 + $0x68] sm:$0xff]
    %v534 = vld [vmem:[%s519 + $0x70] sm:$0xff]
    %v535 = vld [vmem:[%s519 + $0x78] sm:$0xff]
    %v536 = vperm.slane %v438, 2
    %537 = vmatpush.msra.mxu0 %v535
    %538 = vmatpush.msra.mxu0 %v534
    %539 = vmatpush.msra.mxu0 %v533
    %540 = vmatpush.msra.mxu0 %v532
    %541 = vmatpush.msra.mxu0 %v531
    %542 = vmatpush.msra.mxu0 %v530
    %543 = vmatpush.msra.mxu0 %v529
    %544 = vmatpush.msra.mxu0 %v528
    %545 = vmatpush.msra.mxu0 %v527
    %546 = vmatpush.msra.mxu0 %v526
    %547 = vmatpush.msra.mxu0 %v525
    %548 = vmatpush.msra.mxu0 %v524
    %549 = vmatpush.msra.mxu0 %v523
    %550 = vmatpush.msra.mxu0 %v522
    %551 = vmatpush.msra.mxu0 %v521
    %552 = vmatpush.msra.mxu0 %v520
    %553 = vmatmul.f32.gmra.mxu0 %v518
    %v554 = vpop.f32.mrf.mxu0
    %v555 = vadd.f32 %v536, %v554
    %556 = vdwg.mxu0
    %v557 = vmax.f32 %v555, 0.0
    %s558 = scalar_lea.vmem [#allocation2], 384
    %v559 = vld [vmem:[%s558] sm:$0xff]
    %v560 = vld [vmem:[%s558 + $0x8] sm:$0xff]
    %v561 = vld [vmem:[%s558 + $0x10] sm:$0xff]
    %v562 = vld [vmem:[%s558 + $0x18] sm:$0xff]
    %v563 = vld [vmem:[%s558 + $0x20] sm:$0xff]
    %v564 = vld [vmem:[%s558 + $0x28] sm:$0xff]
    %v565 = vld [vmem:[%s558 + $0x30] sm:$0xff]
    %v566 = vld [vmem:[%s558 + $0x38] sm:$0xff]
    %v567 = vld [vmem:[%s558 + $0x40] sm:$0xff]
    %v568 = vld [vmem:[%s558 + $0x48] sm:$0xff]
    %v569 = vld [vmem:[%s558 + $0x50] sm:$0xff]
    %v570 = vld [vmem:[%s558 + $0x58] sm:$0xff]
    %v571 = vld [vmem:[%s558 + $0x60] sm:$0xff]
    %v572 = vld [vmem:[%s558 + $0x68] sm:$0xff]
    %v573 = vld [vmem:[%s558 + $0x70] sm:$0xff]
    %v574 = vld [vmem:[%s558 + $0x78] sm:$0xff]
    %v575 = vperm.slane %v438, 3
    %576 = vmatpush.msra.mxu0 %v574
    %577 = vmatpush.msra.mxu0 %v573
    %578 = vmatpush.msra.mxu0 %v572
    %579 = vmatpush.msra.mxu0 %v571
    %580 = vmatpush.msra.mxu0 %v570
    %581 = vmatpush.msra.mxu0 %v569
    %582 = vmatpush.msra.mxu0 %v568
    %583 = vmatpush.msra.mxu0 %v567
    %584 = vmatpush.msra.mxu0 %v566
    %585 = vmatpush.msra.mxu0 %v565
    %586 = vmatpush.msra.mxu0 %v564
    %587 = vmatpush.msra.mxu0 %v563
    %588 = vmatpush.msra.mxu0 %v562
    %589 = vmatpush.msra.mxu0 %v561
    %590 = vmatpush.msra.mxu0 %v560
    %591 = vmatpush.msra.mxu0 %v559
    %592 = vmatmul.f32.gmra.mxu0 %v557
    %v593 = vpop.f32.mrf.mxu0
    %v594 = vadd.f32 %v575, %v593
    %595 = vdwg.mxu0
    %v596 = vmul.f32 %v594, %v352
    %v597 = vadd.f32 %v517, %v596
    %v598 = vld [vmem:[%s6] sm:$0xff]
    %v599 = vld [vmem:[%s6 + $0x8] sm:$0xff]
    %v600 = vld [vmem:[%s6 + $0x10] sm:$0xff]
    %v601 = vld [vmem:[%s6 + $0x18] sm:$0xff]
    %v602 = vld [vmem:[%s6 + $0x20] sm:$0xff]
    %v603 = vld [vmem:[%s6 + $0x28] sm:$0xff]
    %v604 = vld [vmem:[%s6 + $0x30] sm:$0xff]
    %v605 = vld [vmem:[%s6 + $0x38] sm:$0xff]
    %v606 = vld [vmem:[%s6 + $0x40] sm:$0xff]
    %v607 = vld [vmem:[%s6 + $0x48] sm:$0xff]
    %v608 = vld [vmem:[%s6 + $0x50] sm:$0xff]
    %v609 = vld [vmem:[%s6 + $0x58] sm:$0xff]
    %v610 = vld [vmem:[%s6 + $0x60] sm:$0xff]
    %v611 = vld [vmem:[%s6 + $0x68] sm:$0xff]
    %v612 = vld [vmem:[%s6 + $0x70] sm:$0xff]
    %v613 = vld [vmem:[%s6 + $0x78] sm:$0xff]
    %v614 = vperm.slane %v438, 4
    %615 = vmatpush.msra.mxu0 %v613
    %616 = vmatpush.msra.mxu0 %v612
    %617 = vmatpush.msra.mxu0 %v611
    %618 = vmatpush.msra.mxu0 %v610
    %619 = vmatpush.msra.mxu0 %v609
    %620 = vmatpush.msra.mxu0 %v608
    %621 = vmatpush.msra.mxu0 %v607
    %622 = vmatpush.msra.mxu0 %v606
    %623 = vmatpush.msra.mxu0 %v605
    %624 = vmatpush.msra.mxu0 %v604
    %625 = vmatpush.msra.mxu0 %v603
    %626 = vmatpush.msra.mxu0 %v602
    %627 = vmatpush.msra.mxu0 %v601
    %628 = vmatpush.msra.mxu0 %v600
    %629 = vmatpush.msra.mxu0 %v599
    %630 = vmatpush.msra.mxu0 %v598
    %631 = vmatmul.f32.gmra.mxu0 %v597
    %v632 = vpop.f32.mrf.mxu0
    %v633 = vadd.f32 %v614, %v632
    %634 = vdwg.mxu0
    %v635 = vxor.u32 %v633, 2147483648
    %v636 = vmul.f32 %v635, 1.442695
    %v637 = vpow.pop %v636
    %v638 = vadd.f32 %v637, 1.0
    %v639 = vrcp.pop %v638
    %v640 = vmul.f32 %v638, %v639
    %v641 = vsub.f32 1.0, %v640
    %v642 = vmul.f32 %v639, %v641
    %v643 = vadd.f32 %v639, %v642
    %vm644 = vweird.f32 %v638
    %vm645 = vweird.f32 %v639
    %vm646 = vmor %vm644, %vm645
    %v647 = vsel %vm646, %v639, %v643
    %v648 = vand.u32 2147483647, %v638
    %vm649 = vcmp.eq.f32.partialorder %v648, 8.507059e+37
    %v650 = vand.u32 %v638, 2147483648
    %v651 = vor.u32 1.1754944e-38, %v650
    %v652 = vsel %vm649, %v651, %v647
    %v653 = vmul.f32 1.0, %v652
    %v654 = vadd.f32 %v653, 0.001
    %v655 = vmul.f32 %v654, %v45
    %657 = vrot.lane.b32.xlu0 %v633, 120
    %v658 = vpop.permute.xlu0 %657
    %v660 = vadd.f32 %v655, %v658
    %v661 = vlog2.pop %v654
    %v662 = vmul.f32 %v661, 0.6931472
    %v663 = vadd.f32 %v662, 0.0
    %s664 = scalar_lea.vmem %s2, 8
    %v665 = vld [vmem:[%s664] sm:$0xff]
    %v667 = vsel %vm414, %v660, 0
    %669 = vmatpush.msra.mxu0 0.0
    %670 = vmatpush.msra.mxu0 0.0
    %671 = vmatpush.msra.mxu0 0.0
    %672 = vmatpush.msra.mxu0 0.0
    %673 = vmatpush.msra.mxu0 0.0
    %674 = vmatpush.msra.mxu0 0.0
    %675 = vmatpush.msra.mxu0 0.0
    %676 = vmatpush.msra.mxu0 0.0
    %677 = vmatpush.msra.mxu0 0.0
    %678 = vmatpush.msra.mxu0 0.0
    %679 = vmatpush.msra.mxu0 0.0
    %680 = vmatpush.msra.mxu0 0.0
    %681 = vmatpush.msra.mxu0 0.0
    %682 = vmatpush.msra.mxu0 0.0
    %683 = vmatpush.msra.mxu0 0.0
    %684 = vmatpush.msra.mxu0 %v665
    %685 = vmatmul.f32.gmra.mxu0 %v667
    %v686 = vpop.f32.mrf.mxu0
    %v687 = vadd.f32 %v157, %v686
    %688 = vdwg.mxu0
    %s689 = scalar_lea.vmem %s7, 8
    %v690 = vld [vmem:[%s689] sm:$0xff]
    %v691 = vmax.f32 %v687, 0.0
    %s692 = scalar_lea.vmem [#allocation2], 512
    %v693 = vld [vmem:[%s692] sm:$0xff]
    %v694 = vld [vmem:[%s692 + $0x8] sm:$0xff]
    %v695 = vld [vmem:[%s692 + $0x10] sm:$0xff]
    %v696 = vld [vmem:[%s692 + $0x18] sm:$0xff]
    %v697 = vld [vmem:[%s692 + $0x20] sm:$0xff]
    %v698 = vld [vmem:[%s692 + $0x28] sm:$0xff]
    %v699 = vld [vmem:[%s692 + $0x30] sm:$0xff]
    %v700 = vld [vmem:[%s692 + $0x38] sm:$0xff]
    %v701 = vld [vmem:[%s692 + $0x40] sm:$0xff]
    %v702 = vld [vmem:[%s692 + $0x48] sm:$0xff]
    %v703 = vld [vmem:[%s692 + $0x50] sm:$0xff]
    %v704 = vld [vmem:[%s692 + $0x58] sm:$0xff]
    %v705 = vld [vmem:[%s692 + $0x60] sm:$0xff]
    %v706 = vld [vmem:[%s692 + $0x68] sm:$0xff]
    %v707 = vld [vmem:[%s692 + $0x70] sm:$0xff]
    %v708 = vld [vmem:[%s692 + $0x78] sm:$0xff]
    %v709 = vperm.slane %v690, 0
    %710 = vmatpush.msra.mxu0 %v708
    %711 = vmatpush.msra.mxu0 %v707
    %712 = vmatpush.msra.mxu0 %v706
    %713 = vmatpush.msra.mxu0 %v705
    %714 = vmatpush.msra.mxu0 %v704
    %715 = vmatpush.msra.mxu0 %v703
    %716 = vmatpush.msra.mxu0 %v702
    %717 = vmatpush.msra.mxu0 %v701
    %718 = vmatpush.msra.mxu0 %v700
    %719 = vmatpush.msra.mxu0 %v699
    %720 = vmatpush.msra.mxu0 %v698
    %721 = vmatpush.msra.mxu0 %v697
    %722 = vmatpush.msra.mxu0 %v696
    %723 = vmatpush.msra.mxu0 %v695
    %724 = vmatpush.msra.mxu0 %v694
    %725 = vmatpush.msra.mxu0 %v693
    %726 = vmatmul.f32.gmra.mxu0 %v691
    %v727 = vpop.f32.mrf.mxu0
    %v728 = vadd.f32 %v709, %v727
    %729 = vdwg.mxu0
    %v730 = vmax.f32 %v728, 0.0
    %s731 = scalar_lea.vmem [#allocation2], 640
    %v732 = vld [vmem:[%s731] sm:$0xff]
    %v733 = vld [vmem:[%s731 + $0x8] sm:$0xff]
    %v734 = vld [vmem:[%s731 + $0x10] sm:$0xff]
    %v735 = vld [vmem:[%s731 + $0x18] sm:$0xff]
    %v736 = vld [vmem:[%s731 + $0x20] sm:$0xff]
    %v737 = vld [vmem:[%s731 + $0x28] sm:$0xff]
    %v738 = vld [vmem:[%s731 + $0x30] sm:$0xff]
    %v739 = vld [vmem:[%s731 + $0x38] sm:$0xff]
    %v740 = vld [vmem:[%s731 + $0x40] sm:$0xff]
    %v741 = vld [vmem:[%s731 + $0x48] sm:$0xff]
    %v742 = vld [vmem:[%s731 + $0x50] sm:$0xff]
    %v743 = vld [vmem:[%s731 + $0x58] sm:$0xff]
    %v744 = vld [vmem:[%s731 + $0x60] sm:$0xff]
    %v745 = vld [vmem:[%s731 + $0x68] sm:$0xff]
    %v746 = vld [vmem:[%s731 + $0x70] sm:$0xff]
    %v747 = vld [vmem:[%s731 + $0x78] sm:$0xff]
    %v748 = vperm.slane %v690, 1
    %749 = vmatpush.msra.mxu0 %v747
    %750 = vmatpush.msra.mxu0 %v746
    %751 = vmatpush.msra.mxu0 %v745
    %752 = vmatpush.msra.mxu0 %v744
    %753 = vmatpush.msra.mxu0 %v743
    %754 = vmatpush.msra.mxu0 %v742
    %755 = vmatpush.msra.mxu0 %v741
    %756 = vmatpush.msra.mxu0 %v740
    %757 = vmatpush.msra.mxu0 %v739
    %758 = vmatpush.msra.mxu0 %v738
    %759 = vmatpush.msra.mxu0 %v737
    %760 = vmatpush.msra.mxu0 %v736
    %761 = vmatpush.msra.mxu0 %v735
    %762 = vmatpush.msra.mxu0 %v734
    %763 = vmatpush.msra.mxu0 %v733
    %764 = vmatpush.msra.mxu0 %v732
    %765 = vmatmul.f32.gmra.mxu0 %v730
    %v766 = vpop.f32.mrf.mxu0
    %v767 = vadd.f32 %v748, %v766
    %768 = vdwg.mxu0
    %v769 = vmul.f32 %v767, %v367
    %v770 = vadd.f32 %v687, %v769
    %v771 = vmax.f32 %v770, 0.0
    %s772 = scalar_lea.vmem [#allocation2], 768
    %v773 = vld [vmem:[%s772] sm:$0xff]
    %v774 = vld [vmem:[%s772 + $0x8] sm:$0xff]
    %v775 = vld [vmem:[%s772 + $0x10] sm:$0xff]
    %v776 = vld [vmem:[%s772 + $0x18] sm:$0xff]
    %v777 = vld [vmem:[%s772 + $0x20] sm:$0xff]
    %v778 = vld [vmem:[%s772 + $0x28] sm:$0xff]
    %v779 = vld [vmem:[%s772 + $0x30] sm:$0xff]
    %v780 = vld [vmem:[%s772 + $0x38] sm:$0xff]
    %v781 = vld [vmem:[%s772 + $0x40] sm:$0xff]
    %v782 = vld [vmem:[%s772 + $0x48] sm:$0xff]
    %v783 = vld [vmem:[%s772 + $0x50] sm:$0xff]
    %v784 = vld [vmem:[%s772 + $0x58] sm:$0xff]
    %v785 = vld [vmem:[%s772 + $0x60] sm:$0xff]
    %v786 = vld [vmem:[%s772 + $0x68] sm:$0xff]
    %v787 = vld [vmem:[%s772 + $0x70] sm:$0xff]
    %v788 = vld [vmem:[%s772 + $0x78] sm:$0xff]
    %v789 = vperm.slane %v690, 2
    %790 = vmatpush.msra.mxu0 %v788
    %791 = vmatpush.msra.mxu0 %v787
    %792 = vmatpush.msra.mxu0 %v786
    %793 = vmatpush.msra.mxu0 %v785
    %794 = vmatpush.msra.mxu0 %v784
    %795 = vmatpush.msra.mxu0 %v783
    %796 = vmatpush.msra.mxu0 %v782
    %797 = vmatpush.msra.mxu0 %v781
    %798 = vmatpush.msra.mxu0 %v780
    %799 = vmatpush.msra.mxu0 %v779
    %800 = vmatpush.msra.mxu0 %v778
    %801 = vmatpush.msra.mxu0 %v777
    %802 = vmatpush.msra.mxu0 %v776
    %803 = vmatpush.msra.mxu0 %v775
    %804 = vmatpush.msra.mxu0 %v774
    %805 = vmatpush.msra.mxu0 %v773
    %806 = vmatmul.f32.gmra.mxu0 %v771
    %v807 = vpop.f32.mrf.mxu0
    %v808 = vadd.f32 %v789, %v807
    %809 = vdwg.mxu0
    %v810 = vmax.f32 %v808, 0.0
    %s811 = scalar_lea.vmem [#allocation2], 896
    %v812 = vld [vmem:[%s811] sm:$0xff]
    %v813 = vld [vmem:[%s811 + $0x8] sm:$0xff]
    %v814 = vld [vmem:[%s811 + $0x10] sm:$0xff]
    %v815 = vld [vmem:[%s811 + $0x18] sm:$0xff]
    %v816 = vld [vmem:[%s811 + $0x20] sm:$0xff]
    %v817 = vld [vmem:[%s811 + $0x28] sm:$0xff]
    %v818 = vld [vmem:[%s811 + $0x30] sm:$0xff]
    %v819 = vld [vmem:[%s811 + $0x38] sm:$0xff]
    %v820 = vld [vmem:[%s811 + $0x40] sm:$0xff]
    %v821 = vld [vmem:[%s811 + $0x48] sm:$0xff]
    %v822 = vld [vmem:[%s811 + $0x50] sm:$0xff]
    %v823 = vld [vmem:[%s811 + $0x58] sm:$0xff]
    %v824 = vld [vmem:[%s811 + $0x60] sm:$0xff]
    %v825 = vld [vmem:[%s811 + $0x68] sm:$0xff]
    %v826 = vld [vmem:[%s811 + $0x70] sm:$0xff]
    %v827 = vld [vmem:[%s811 + $0x78] sm:$0xff]
    %v828 = vperm.slane %v690, 3
    %829 = vmatpush.msra.mxu0 %v827
    %830 = vmatpush.msra.mxu0 %v826
    %831 = vmatpush.msra.mxu0 %v825
    %832 = vmatpush.msra.mxu0 %v824
    %833 = vmatpush.msra.mxu0 %v823
    %834 = vmatpush.msra.mxu0 %v822
    %835 = vmatpush.msra.mxu0 %v821
    %836 = vmatpush.msra.mxu0 %v820
    %837 = vmatpush.msra.mxu0 %v819
    %838 = vmatpush.msra.mxu0 %v818
    %839 = vmatpush.msra.mxu0 %v817
    %840 = vmatpush.msra.mxu0 %v816
    %841 = vmatpush.msra.mxu0 %v815
    %842 = vmatpush.msra.mxu0 %v814
    %843 = vmatpush.msra.mxu0 %v813
    %844 = vmatpush.msra.mxu0 %v812
    %845 = vmatmul.f32.gmra.mxu0 %v810
    %v846 = vpop.f32.mrf.mxu0
    %v847 = vadd.f32 %v828, %v846
    %848 = vdwg.mxu0
    %v849 = vmul.f32 %v847, %v382
    %v850 = vadd.f32 %v770, %v849
    %s851 = scalar_lea.vmem %s6, 128
    %v852 = vld [vmem:[%s851] sm:$0xff]
    %v853 = vld [vmem:[%s851 + $0x8] sm:$0xff]
    %v854 = vld [vmem:[%s851 + $0x10] sm:$0xff]
    %v855 = vld [vmem:[%s851 + $0x18] sm:$0xff]
    %v856 = vld [vmem:[%s851 + $0x20] sm:$0xff]
    %v857 = vld [vmem:[%s851 + $0x28] sm:$0xff]
    %v858 = vld [vmem:[%s851 + $0x30] sm:$0xff]
    %v859 = vld [vmem:[%s851 + $0x38] sm:$0xff]
    %v860 = vld [vmem:[%s851 + $0x40] sm:$0xff]
    %v861 = vld [vmem:[%s851 + $0x48] sm:$0xff]
    %v862 = vld [vmem:[%s851 + $0x50] sm:$0xff]
    %v863 = vld [vmem:[%s851 + $0x58] sm:$0xff]
    %v864 = vld [vmem:[%s851 + $0x60] sm:$0xff]
    %v865 = vld [vmem:[%s851 + $0x68] sm:$0xff]
    %v866 = vld [vmem:[%s851 + $0x70] sm:$0xff]
    %v867 = vld [vmem:[%s851 + $0x78] sm:$0xff]
    %v868 = vperm.slane %v690, 4
    %869 = vmatpush.msra.mxu0 %v867
    %870 = vmatpush.msra.mxu0 %v866
    %871 = vmatpush.msra.mxu0 %v865
    %872 = vmatpush.msra.mxu0 %v864
    %873 = vmatpush.msra.mxu0 %v863
    %874 = vmatpush.msra.mxu0 %v862
    %875 = vmatpush.msra.mxu0 %v861
    %876 = vmatpush.msra.mxu0 %v860
    %877 = vmatpush.msra.mxu0 %v859
    %878 = vmatpush.msra.mxu0 %v858
    %879 = vmatpush.msra.mxu0 %v857
    %880 = vmatpush.msra.mxu0 %v856
    %881 = vmatpush.msra.mxu0 %v855
    %882 = vmatpush.msra.mxu0 %v854
    %883 = vmatpush.msra.mxu0 %v853
    %884 = vmatpush.msra.mxu0 %v852
    %885 = vmatmul.f32.gmra.mxu0 %v850
    %v886 = vpop.f32.mrf.mxu0
    %v887 = vadd.f32 %v868, %v886
    %888 = vdwg.mxu0
    %v889 = vxor.u32 %v887, 2147483648
    %v890 = vmul.f32 %v889, 1.442695
    %v891 = vpow.pop %v890
    %v892 = vadd.f32 %v891, 1.0
    %v893 = vrcp.pop %v892
    %v894 = vmul.f32 %v892, %v893
    %v895 = vsub.f32 1.0, %v894
    %v896 = vmul.f32 %v893, %v895
    %v897 = vadd.f32 %v893, %v896
    %vm898 = vweird.f32 %v892
    %vm899 = vweird.f32 %v893
    %vm900 = vmor %vm898, %vm899
    %v901 = vsel %vm900, %v893, %v897
    %v902 = vand.u32 2147483647, %v892
    %vm903 = vcmp.eq.f32.partialorder %v902, 8.507059e+37
    %v904 = vand.u32 %v892, 2147483648
    %v905 = vor.u32 1.1754944e-38, %v904
    %v906 = vsel %vm903, %v905, %v901
    %v907 = vmul.f32 1.0, %v906
    %v908 = vadd.f32 %v907, 0.001
    %v909 = vmul.f32 %v908, %v660
    %911 = vrot.lane.b32.xlu0 %v887, 120
    %v912 = vpop.permute.xlu0 %911
    %v914 = vadd.f32 %v909, %v912
    %v915 = vlog2.pop %v908
    %v916 = vmul.f32 %v915, 0.6931472
    %v917 = vadd.f32 %v663, %v916
    %s918 = scalar_lea.vmem %s2, 16
    %v919 = vld [vmem:[%s918] sm:$0xff]
    %v921 = vsel %vm414, %v914, 0
    %923 = vmatpush.msra.mxu0 0.0
    %924 = vmatpush.msra.mxu0 0.0
    %925 = vmatpush.msra.mxu0 0.0
    %926 = vmatpush.msra.mxu0 0.0
    %927 = vmatpush.msra.mxu0 0.0
    %928 = vmatpush.msra.mxu0 0.0
    %929 = vmatpush.msra.mxu0 0.0
    %930 = vmatpush.msra.mxu0 0.0
    %931 = vmatpush.msra.mxu0 0.0
    %932 = vmatpush.msra.mxu0 0.0
    %933 = vmatpush.msra.mxu0 0.0
    %934 = vmatpush.msra.mxu0 0.0
    %935 = vmatpush.msra.mxu0 0.0
    %936 = vmatpush.msra.mxu0 0.0
    %937 = vmatpush.msra.mxu0 0.0
    %938 = vmatpush.msra.mxu0 %v919
    %939 = vmatmul.f32.gmra.mxu0 %v921
    %v940 = vpop.f32.mrf.mxu0
    %v941 = vadd.f32 %v177, %v940
    %942 = vdwg.mxu0
    %s943 = scalar_lea.vmem %s7, 16
    %v944 = vld [vmem:[%s943] sm:$0xff]
    %v945 = vmax.f32 %v941, 0.0
    %s946 = scalar_lea.vmem [#allocation2], 1024
    %v947 = vld [vmem:[%s946] sm:$0xff]
    %v948 = vld [vmem:[%s946 + $0x8] sm:$0xff]
    %v949 = vld [vmem:[%s946 + $0x10] sm:$0xff]
    %v950 = vld [vmem:[%s946 + $0x18] sm:$0xff]
    %v951 = vld [vmem:[%s946 + $0x20] sm:$0xff]
    %v952 = vld [vmem:[%s946 + $0x28] sm:$0xff]
    %v953 = vld [vmem:[%s946 + $0x30] sm:$0xff]
    %v954 = vld [vmem:[%s946 + $0x38] sm:$0xff]
    %v955 = vld [vmem:[%s946 + $0x40] sm:$0xff]
    %v956 = vld [vmem:[%s946 + $0x48] sm:$0xff]
    %v957 = vld [vmem:[%s946 + $0x50] sm:$0xff]
    %v958 = vld [vmem:[%s946 + $0x58] sm:$0xff]
    %v959 = vld [vmem:[%s946 + $0x60] sm:$0xff]
    %v960 = vld [vmem:[%s946 + $0x68] sm:$0xff]
    %v961 = vld [vmem:[%s946 + $0x70] sm:$0xff]
    %v962 = vld [vmem:[%s946 + $0x78] sm:$0xff]
    %v963 = vperm.slane %v944, 0
    %964 = vmatpush.msra.mxu0 %v962
    %965 = vmatpush.msra.mxu0 %v961
    %966 = vmatpush.msra.mxu0 %v960
    %967 = vmatpush.msra.mxu0 %v959
    %968 = vmatpush.msra.mxu0 %v958
    %969 = vmatpush.msra.mxu0 %v957
    %970 = vmatpush.msra.mxu0 %v956
    %971 = vmatpush.msra.mxu0 %v955
    %972 = vmatpush.msra.mxu0 %v954
    %973 = vmatpush.msra.mxu0 %v953
    %974 = vmatpush.msra.mxu0 %v952
    %975 = vmatpush.msra.mxu0 %v951
    %976 = vmatpush.msra.mxu0 %v950
    %977 = vmatpush.msra.mxu0 %v949
    %978 = vmatpush.msra.mxu0 %v948
    %979 = vmatpush.msra.mxu0 %v947
    %980 = vmatmul.f32.gmra.mxu0 %v945
    %v981 = vpop.f32.mrf.mxu0
    %v982 = vadd.f32 %v963, %v981
    %983 = vdwg.mxu0
    %v984 = vmax.f32 %v982, 0.0
    %s985 = scalar_lea.vmem [#allocation2], 1152
    %v986 = vld [vmem:[%s985] sm:$0xff]
    %v987 = vld [vmem:[%s985 + $0x8] sm:$0xff]
    %v988 = vld [vmem:[%s985 + $0x10] sm:$0xff]
    %v989 = vld [vmem:[%s985 + $0x18] sm:$0xff]
    %v990 = vld [vmem:[%s985 + $0x20] sm:$0xff]
    %v991 = vld [vmem:[%s985 + $0x28] sm:$0xff]
    %v992 = vld [vmem:[%s985 + $0x30] sm:$0xff]
    %v993 = vld [vmem:[%s985 + $0x38] sm:$0xff]
    %v994 = vld [vmem:[%s985 + $0x40] sm:$0xff]
    %v995 = vld [vmem:[%s985 + $0x48] sm:$0xff]
    %v996 = vld [vmem:[%s985 + $0x50] sm:$0xff]
    %v997 = vld [vmem:[%s985 + $0x58] sm:$0xff]
    %v998 = vld [vmem:[%s985 + $0x60] sm:$0xff]
    %v999 = vld [vmem:[%s985 + $0x68] sm:$0xff]
    %v1000 = vld [vmem:[%s985 + $0x70] sm:$0xff]
    %v1001 = vld [vmem:[%s985 + $0x78] sm:$0xff]
    %v1002 = vperm.slane %v944, 1
    %1003 = vmatpush.msra.mxu0 %v1001
    %1004 = vmatpush.msra.mxu0 %v1000
    %1005 = vmatpush.msra.mxu0 %v999
    %1006 = vmatpush.msra.mxu0 %v998
    %1007 = vmatpush.msra.mxu0 %v997
    %1008 = vmatpush.msra.mxu0 %v996
    %1009 = vmatpush.msra.mxu0 %v995
    %1010 = vmatpush.msra.mxu0 %v994
    %1011 = vmatpush.msra.mxu0 %v993
    %1012 = vmatpush.msra.mxu0 %v992
    %1013 = vmatpush.msra.mxu0 %v991
    %1014 = vmatpush.msra.mxu0 %v990
    %1015 = vmatpush.msra.mxu0 %v989
    %1016 = vmatpush.msra.mxu0 %v988
    %1017 = vmatpush.msra.mxu0 %v987
    %1018 = vmatpush.msra.mxu0 %v986
    %1019 = vmatmul.f32.gmra.mxu0 %v984
    %v1020 = vpop.f32.mrf.mxu0
    %v1021 = vadd.f32 %v1002, %v1020
    %1022 = vdwg.mxu0
    %v1023 = vmul.f32 %v1021, %v397
    %v1024 = vadd.f32 %v941, %v1023
    %v1025 = vmax.f32 %v1024, 0.0
    %s1026 = scalar_lea.vmem [#allocation2], 1280
    %v1027 = vld [vmem:[%s1026] sm:$0xff]
    %v1028 = vld [vmem:[%s1026 + $0x8] sm:$0xff]
    %v1029 = vld [vmem:[%s1026 + $0x10] sm:$0xff]
    %v1030 = vld [vmem:[%s1026 + $0x18] sm:$0xff]
    %v1031 = vld [vmem:[%s1026 + $0x20] sm:$0xff]
    %v1032 = vld [vmem:[%s1026 + $0x28] sm:$0xff]
    %v1033 = vld [vmem:[%s1026 + $0x30] sm:$0xff]
    %v1034 = vld [vmem:[%s1026 + $0x38] sm:$0xff]
    %v1035 = vld [vmem:[%s1026 + $0x40] sm:$0xff]
    %v1036 = vld [vmem:[%s1026 + $0x48] sm:$0xff]
    %v1037 = vld [vmem:[%s1026 + $0x50] sm:$0xff]
    %v1038 = vld [vmem:[%s1026 + $0x58] sm:$0xff]
    %v1039 = vld [vmem:[%s1026 + $0x60] sm:$0xff]
    %v1040 = vld [vmem:[%s1026 + $0x68] sm:$0xff]
    %v1041 = vld [vmem:[%s1026 + $0x70] sm:$0xff]
    %v1042 = vld [vmem:[%s1026 + $0x78] sm:$0xff]
    %v1043 = vperm.slane %v944, 2
    %1044 = vmatpush.msra.mxu0 %v1042
    %1045 = vmatpush.msra.mxu0 %v1041
    %1046 = vmatpush.msra.mxu0 %v1040
    %1047 = vmatpush.msra.mxu0 %v1039
    %1048 = vmatpush.msra.mxu0 %v1038
    %1049 = vmatpush.msra.mxu0 %v1037
    %1050 = vmatpush.msra.mxu0 %v1036
    %1051 = vmatpush.msra.mxu0 %v1035
    %1052 = vmatpush.msra.mxu0 %v1034
    %1053 = vmatpush.msra.mxu0 %v1033
    %1054 = vmatpush.msra.mxu0 %v1032
    %1055 = vmatpush.msra.mxu0 %v1031
    %1056 = vmatpush.msra.mxu0 %v1030
    %1057 = vmatpush.msra.mxu0 %v1029
    %1058 = vmatpush.msra.mxu0 %v1028
    %1059 = vmatpush.msra.mxu0 %v1027
    %1060 = vmatmul.f32.gmra.mxu0 %v1025
    %v1061 = vpop.f32.mrf.mxu0
    %v1062 = vadd.f32 %v1043, %v1061
    %1063 = vdwg.mxu0
    %v1064 = vmax.f32 %v1062, 0.0
    %s1065 = scalar_lea.vmem [#allocation2], 1408
    %v1066 = vld [vmem:[%s1065] sm:$0xff]
    %v1067 = vld [vmem:[%s1065 + $0x8] sm:$0xff]
    %v1068 = vld [vmem:[%s1065 + $0x10] sm:$0xff]
    %v1069 = vld [vmem:[%s1065 + $0x18] sm:$0xff]
    %v1070 = vld [vmem:[%s1065 + $0x20] sm:$0xff]
    %v1071 = vld [vmem:[%s1065 + $0x28] sm:$0xff]
    %v1072 = vld [vmem:[%s1065 + $0x30] sm:$0xff]
    %v1073 = vld [vmem:[%s1065 + $0x38] sm:$0xff]
    %v1074 = vld [vmem:[%s1065 + $0x40] sm:$0xff]
    %v1075 = vld [vmem:[%s1065 + $0x48] sm:$0xff]
    %v1076 = vld [vmem:[%s1065 + $0x50] sm:$0xff]
    %v1077 = vld [vmem:[%s1065 + $0x58] sm:$0xff]
    %v1078 = vld [vmem:[%s1065 + $0x60] sm:$0xff]
    %v1079 = vld [vmem:[%s1065 + $0x68] sm:$0xff]
    %v1080 = vld [vmem:[%s1065 + $0x70] sm:$0xff]
    %v1081 = vld [vmem:[%s1065 + $0x78] sm:$0xff]
    %v1082 = vperm.slane %v944, 3
    %1083 = vmatpush.msra.mxu0 %v1081
    %1084 = vmatpush.msra.mxu0 %v1080
    %1085 = vmatpush.msra.mxu0 %v1079
    %1086 = vmatpush.msra.mxu0 %v1078
    %1087 = vmatpush.msra.mxu0 %v1077
    %1088 = vmatpush.msra.mxu0 %v1076
    %1089 = vmatpush.msra.mxu0 %v1075
    %1090 = vmatpush.msra.mxu0 %v1074
    %1091 = vmatpush.msra.mxu0 %v1073
    %1092 = vmatpush.msra.mxu0 %v1072
    %1093 = vmatpush.msra.mxu0 %v1071
    %1094 = vmatpush.msra.mxu0 %v1070
    %1095 = vmatpush.msra.mxu0 %v1069
    %1096 = vmatpush.msra.mxu0 %v1068
    %1097 = vmatpush.msra.mxu0 %v1067
    %1098 = vmatpush.msra.mxu0 %v1066
    %1099 = vmatmul.f32.gmra.mxu0 %v1064
    %v1100 = vpop.f32.mrf.mxu0
    %v1101 = vadd.f32 %v1082, %v1100
    %1102 = vdwg.mxu0
    %v1103 = vmul.f32 %v1101, %v412
    %v1104 = vadd.f32 %v1024, %v1103
    %s1105 = scalar_lea.vmem %s6, 256
    %v1106 = vld [vmem:[%s1105] sm:$0xff]
    %v1107 = vld [vmem:[%s1105 + $0x8] sm:$0xff]
    %v1108 = vld [vmem:[%s1105 + $0x10] sm:$0xff]
    %v1109 = vld [vmem:[%s1105 + $0x18] sm:$0xff]
    %v1110 = vld [vmem:[%s1105 + $0x20] sm:$0xff]
    %v1111 = vld [vmem:[%s1105 + $0x28] sm:$0xff]
    %v1112 = vld [vmem:[%s1105 + $0x30] sm:$0xff]
    %v1113 = vld [vmem:[%s1105 + $0x38] sm:$0xff]
    %v1114 = vld [vmem:[%s1105 + $0x40] sm:$0xff]
    %v1115 = vld [vmem:[%s1105 + $0x48] sm:$0xff]
    %v1116 = vld [vmem:[%s1105 + $0x50] sm:$0xff]
    %v1117 = vld [vmem:[%s1105 + $0x58] sm:$0xff]
    %v1118 = vld [vmem:[%s1105 + $0x60] sm:$0xff]
    %v1119 = vld [vmem:[%s1105 + $0x68] sm:$0xff]
    %v1120 = vld [vmem:[%s1105 + $0x70] sm:$0xff]
    %v1121 = vld [vmem:[%s1105 + $0x78] sm:$0xff]
    %v1122 = vperm.slane %v944, 4
    %1123 = vmatpush.msra.mxu0 %v1121
    %1124 = vmatpush.msra.mxu0 %v1120
    %1125 = vmatpush.msra.mxu0 %v1119
    %1126 = vmatpush.msra.mxu0 %v1118
    %1127 = vmatpush.msra.mxu0 %v1117
    %1128 = vmatpush.msra.mxu0 %v1116
    %1129 = vmatpush.msra.mxu0 %v1115
    %1130 = vmatpush.msra.mxu0 %v1114
    %1131 = vmatpush.msra.mxu0 %v1113
    %1132 = vmatpush.msra.mxu0 %v1112
    %1133 = vmatpush.msra.mxu0 %v1111
    %1134 = vmatpush.msra.mxu0 %v1110
    %1135 = vmatpush.msra.mxu0 %v1109
    %1136 = vmatpush.msra.mxu0 %v1108
    %1137 = vmatpush.msra.mxu0 %v1107
    %1138 = vmatpush.msra.mxu0 %v1106
    %1139 = vmatmul.f32.gmra.mxu0 %v1104
    %v1140 = vpop.f32.mrf.mxu0
    %v1141 = vadd.f32 %v1122, %v1140
    %1142 = vdwg.mxu0
    %v1143 = vxor.u32 %v1141, 2147483648
    %v1144 = vmul.f32 %v1143, 1.442695
    %v1145 = vpow.pop %v1144
    %v1146 = vadd.f32 %v1145, 1.0
    %v1147 = vrcp.pop %v1146
    %v1148 = vmul.f32 %v1146, %v1147
    %v1149 = vsub.f32 1.0, %v1148
    %v1150 = vmul.f32 %v1147, %v1149
    %v1151 = vadd.f32 %v1147, %v1150
    %vm1152 = vweird.f32 %v1146
    %vm1153 = vweird.f32 %v1147
    %vm1154 = vmor %vm1152, %vm1153
    %v1155 = vsel %vm1154, %v1147, %v1151
    %v1156 = vand.u32 2147483647, %v1146
    %vm1157 = vcmp.eq.f32.partialorder %v1156, 8.507059e+37
    %v1158 = vand.u32 %v1146, 2147483648
    %v1159 = vor.u32 1.1754944e-38, %v1158
    %v1160 = vsel %vm1157, %v1159, %v1155
    %v1161 = vmul.f32 1.0, %v1160
    %v1162 = vadd.f32 %v1161, 0.001
    %v1163 = vmul.f32 %v1162, %v914
    %1165 = vrot.lane.b32.xlu0 %v1141, 120
    %v1166 = vpop.permute.xlu0 %1165
    %v1168 = vadd.f32 %v1163, %v1166
    %v1169 = vlog2.pop %v1162
    %v1170 = vmul.f32 %v1169, 0.6931472
    %v1171 = vadd.f32 %v917, %v1170
    %v1172 = vmul.f32 %v1168, %v1168
    %v1173 = vsel %vm414, %v1172, 0.0
    %1174 = vadd.xlane.f32.xlu0 %v1173
    %v1175 = vpop.xlane.xlu0 %1174
    %v1176 = vmul.f32 %v1175, -0.5
    %v1177 = vsub.f32 %v1176, 7.351508
    %v1178 = vsel %vm414, %v1171, 0.0
    %1179 = vadd.xlane.f32.xlu0 %v1178
    %v1180 = vpop.xlane.xlu0 %1179
    %v1181 = vadd.f32 %v1177, %v1180
    %vm1182 = vcmask 7168
    %1183 = vst.msk [vmem:[%s8] sm:$0xff] %vm1182, %v1181
    // Predicated region
    $region38: #{tpu_custom_call.1} parent=1 // pred_check
      _
    $region39: #{tpu_custom_call.1} parent=1 // pred_check_branch
      %1185 = sbr.rel (0) target = $region41
    $region40: #{tpu_custom_call.1} parent=1 // pred_region
      _
    $region41: #{tpu_custom_call.1} parent=1 // pred_fallthru
      _
    // Predicated region
    $region42: #{tpu_custom_call.1} parent=1 // pred_check
      _
    $region43: #{tpu_custom_call.1} parent=1 // pred_check_branch
      %1187 = sbr.rel (0) target = $region45
    $region44: #{tpu_custom_call.1} parent=1 // pred_region
      _
    $region45: #{tpu_custom_call.1} parent=1 // pred_fallthru
      _
    %1188 = vsyncpa [#allocation3], 1

</llo_original>
